<compile_context>
chip_gen: v7x
topology: tpu7x:2x2x1
jax: 0.10.0
libtpu: 0.0.40
codegen_flags: <defaults>
</compile_context>

<pallas_src>
import functools

import jax
import jax.numpy as jnp
from jax.experimental import pallas as pl
from jax.experimental.pallas import tpu as pltpu


def _basic_block_kernel(x_ref, w1_ref, w2_ref, sb_ref, out_ref, *,
                        width, compute_dtype):
    # x_ref  : (1, C, H*W)  one batch element, channel-major, lane-dense spatial
    # w*_ref : (9, C, C)    conv weights, [ky*3+kx] -> (Cout, Cin)
    # sb_ref : (4, C, 1)    folded BN params: [scale1, bias1, scale2, bias2]
    # out_ref: (1, C, H*W)
    _, C, HW = x_ref.shape
    W = width

    x = x_ref[0]  # (C, HW)

    # Lane-position masks for the horizontal halo (the flat row layout wraps
    # x-1 / x+1 into the neighbouring row's edge element, which must be zero).
    col = jax.lax.broadcasted_iota(jnp.int32, (1, HW), 1) % W
    not_first_col = col != 0          # valid lanes for kx == 0 (shift x-1)
    not_last_col = col != (W - 1)     # valid lanes for kx == 2 (shift x+1)

    def conv3x3(inp, w_ref):
        # Row-pad the flat (C, H*W) map: one zero row above and below plus one
        # extra zero lane so every tap is a non-negative contiguous lane slice.
        pad = jnp.zeros((C, W + 1), inp.dtype)
        xp = jnp.concatenate([pad, inp, pad], axis=1)   # (C, HW + 2W + 2)
        acc = jnp.zeros((C, HW), jnp.float32)
        for ky in range(3):
            for kx in range(3):
                start = ky * W + kx
                tap = xp[:, start:start + HW]           # (Cin, HW) lane slice
                if kx == 0:
                    tap = jnp.where(not_first_col, tap, 0.0)
                elif kx == 2:
                    tap = jnp.where(not_last_col, tap, 0.0)
                w_tap = w_ref[ky * 3 + kx]              # (Cout, Cin)
                # MXU: output is (Cout, HW) -> full 128-lane occupancy.
                acc += jnp.dot(w_tap.astype(compute_dtype),
                               tap.astype(compute_dtype),
                               preferred_element_type=jnp.float32)
        return acc  # (Cout, HW) f32

    s1, b1 = sb_ref[0], sb_ref[1]   # (C, 1) each
    s2, b2 = sb_ref[2], sb_ref[3]

    # conv1 -> bn1 -> relu   (h1 stays in registers, no VMEM round trip)
    h1 = jnp.maximum(conv3x3(x, w1_ref) * s1 + b1, 0.0)
    # conv2 -> bn2 -> +residual -> relu
    h2 = conv3x3(h1, w2_ref) * s2 + b2
    out = jnp.maximum(h2 + x.astype(jnp.float32), 0.0)
    out_ref[0] = out.astype(out_ref.dtype)


def basic_block_pallas(x_nchw, w1_oihw, w2_oihw, scale1, bias1, scale2, bias2,
                       compute_dtype=jnp.float32):
    """Fused BasicBlock forward (stride=1, downsample=None), NCHW in/out.

    compute_dtype: MXU operand dtype (use jnp.bfloat16 on v6e/v7x for the
    fast MXU path; accumulation stays f32 either way).
    """
    N, C, H, W = x_nchw.shape
    HW = H * W

    x_flat = x_nchw.reshape(N, C, HW)                      # free reshape
    # OIHW (Cout, Cin, 3, 3) -> (ky, kx, Cout, Cin) -> (9, Cout, Cin)
    w1 = jnp.transpose(w1_oihw, (2, 3, 0, 1)).reshape(9, C, C)
    w2 = jnp.transpose(w2_oihw, (2, 3, 0, 1)).reshape(9, C, C)
    sb = jnp.stack([scale1, bias1, scale2, bias2]).reshape(4, C, 1)

    kernel = functools.partial(_basic_block_kernel, width=W,
                               compute_dtype=compute_dtype)

    out = pl.pallas_call(
        kernel,
        out_shape=jax.ShapeDtypeStruct((N, C, HW), x_nchw.dtype),
        grid_spec=pltpu.PrefetchScalarGridSpec(
            num_scalar_prefetch=0,
            grid=(N,),
            in_specs=[
                pl.BlockSpec((1, C, HW), lambda n: (n, 0, 0)),
                pl.BlockSpec((9, C, C), lambda n: (0, 0, 0)),
                pl.BlockSpec((9, C, C), lambda n: (0, 0, 0)),
                pl.BlockSpec((4, C, 1), lambda n: (0, 0, 0)),
            ],
            out_specs=pl.BlockSpec((1, C, HW), lambda n: (n, 0, 0)),
        ),
        compiler_params=pltpu.CompilerParams(
            dimension_semantics=("parallel",)),
    )(x_flat, w1, w2, sb)

    return out.reshape(N, C, H, W)


def basic_block_reference(x_nchw, w1_oihw, w2_oihw, scale1, bias1, scale2, bias2):
    """Pure-JAX reference (lax conv, NCHW/OIHW) for verification."""
    dn = jax.lax.conv_dimension_numbers(x_nchw.shape, w1_oihw.shape,
                                        ("NCHW", "OIHW", "NCHW"))

    def bn(y, s, b):
        return y * s[None, :, None, None] + b[None, :, None, None]

    out = jax.lax.conv_general_dilated(x_nchw, w1_oihw, (1, 1), "SAME",
                                       dimension_numbers=dn)
    out = jnp.maximum(bn(out, scale1, bias1), 0.0)
    out = jax.lax.conv_general_dilated(out, w2_oihw, (1, 1), "SAME",
                                       dimension_numbers=dn)
    out = bn(out, scale2, bias2)
    return jnp.maximum(out + x_nchw, 0.0)


def fold_bn(gamma, beta, running_mean, running_var, eps=1e-5):
    scale = gamma / jnp.sqrt(running_var + eps)
    bias = beta - running_mean * scale
    return scale, bias


if __name__ == "__main__":
    # Small shapes consistent with the module: inplanes = planes = 4 (stride=1,
    # downsample=None), batch=2, spatial 16x16.
    N, C, H, W = 2, 4, 16, 16

    key = jax.random.PRNGKey(0)
    ks = jax.random.split(key, 11)

    # Input / weights in PyTorch conventions (NCHW, OIHW).
    x_nchw = jax.random.normal(ks[0], (N, C, H, W), dtype=jnp.float32)
    w1_oihw = jax.random.normal(ks[1], (C, C, 3, 3), dtype=jnp.float32) * 0.2
    w2_oihw = jax.random.normal(ks[2], (C, C, 3, 3), dtype=jnp.float32) * 0.2

    # BatchNorm parameters, folded to scale/bias (inference mode).
    g1 = 1.0 + 0.1 * jax.random.normal(ks[3], (C,), dtype=jnp.float32)
    b1 = 0.1 * jax.random.normal(ks[4], (C,), dtype=jnp.float32)
    m1 = 0.1 * jax.random.normal(ks[5], (C,), dtype=jnp.float32)
    v1 = jax.random.uniform(ks[6], (C,), dtype=jnp.float32, minval=0.5, maxval=1.5)
    g2 = 1.0 + 0.1 * jax.random.normal(ks[7], (C,), dtype=jnp.float32)
    b2 = 0.1 * jax.random.normal(ks[8], (C,), dtype=jnp.float32)
    m2 = 0.1 * jax.random.normal(ks[9], (C,), dtype=jnp.float32)
    v2 = jax.random.uniform(ks[10], (C,), dtype=jnp.float32, minval=0.5, maxval=1.5)

    scale1, bias1 = fold_bn(g1, b1, m1, v1)
    scale2, bias2 = fold_bn(g2, b2, m2, v2)

    out = basic_block_pallas(x_nchw, w1_oihw, w2_oihw,
                             scale1, bias1, scale2, bias2)
    out = jax.block_until_ready(out)

    ref = basic_block_reference(x_nchw, w1_oihw, w2_oihw,
                                scale1, bias1, scale2, bias2)
    ref = jax.block_until_ready(ref)

    assert out.shape == x_nchw.shape
    assert jnp.allclose(out, ref, atol=1e-3, rtol=1e-3), (
        float(jnp.max(jnp.abs(out - ref))))

    print("KERNEL_OK")
</pallas_src>

<mosaic_0001>
module attributes {stable_mosaic.version = 11 : i64} {
  func.func @_basic_block_kernel(%arg0: i32, %arg1: memref<1x4x256xf32, #tpu.memory_space<vmem>>, %arg2: memref<9x4x4xf32, #tpu.memory_space<vmem>>, %arg3: memref<9x4x4xf32, #tpu.memory_space<vmem>>, %arg4: memref<4x4x1xf32, #tpu.memory_space<vmem>>, %arg5: memref<1x4x256xf32, #tpu.memory_space<vmem>>) attributes {dimension_semantics = [#tpu.dimension_semantics<parallel>], iteration_bounds = array<i64: 2>, scalar_prefetch = 0 : i64, scratch_operands = 0 : i64, tpu.core_type = #tpu.core_type<tc>, window_params = [{transform_indices = @transform_0, window_bounds = array<i64: 1, 4, 256>}, {pipeline_mode = #tpu.pipeline_mode<synchronous>, transform_indices = @transform_1, window_bounds = array<i64: 9, 4, 4>}, {pipeline_mode = #tpu.pipeline_mode<synchronous>, transform_indices = @transform_2, window_bounds = array<i64: 9, 4, 4>}, {pipeline_mode = #tpu.pipeline_mode<synchronous>, transform_indices = @transform_3, window_bounds = array<i64: 4, 4, 1>}, {transform_indices = @transform_4, window_bounds = array<i64: 1, 4, 256>}]} {
    %c0 = arith.constant 0 : index
    %c0_0 = arith.constant 0 : index
    %c0_1 = arith.constant 0 : index
    %0 = vector.load %arg1[%c0, %c0_0, %c0_1] : memref<1x4x256xf32, #tpu.memory_space<vmem>>, vector<1x4x256xf32>
    %1 = vector.shape_cast %0 : vector<1x4x256xf32> to vector<4x256xf32>
    %2 = tpu.iota {dimensions = array<i32: 1>} : vector<1x256xi32>
    %c16_i32 = arith.constant 16 : i32
    %c0_i32 = arith.constant 0 : i32
    %3 = arith.cmpi eq, %c16_i32, %c0_i32 : i32
    %c1_i32 = arith.constant 1 : i32
    %4 = arith.select %3, %c1_i32, %c16_i32 : i32
    %5 = vector.broadcast %4 : i32 to vector<1x256xi32>
    %6 = arith.remsi %2, %5 : vector<1x256xi32>
    %c0_i32_2 = arith.constant 0 : i32
    %7 = vector.broadcast %c0_i32_2 : i32 to vector<1x256xi32>
    %8 = arith.cmpi ne, %6, %7 : vector<1x256xi32>
    %c0_i32_3 = arith.constant 0 : i32
    %9 = vector.broadcast %c0_i32_3 : i32 to vector<1x256xi32>
    %10 = arith.cmpi slt, %6, %9 : vector<1x256xi32>
    %c0_i32_4 = arith.constant 0 : i32
    %11 = arith.cmpi slt, %4, %c0_i32_4 : i32
    %12 = vector.broadcast %11 : i1 to vector<1x256xi1>
    %13 = vector.broadcast %12 : vector<1x256xi1> to vector<1x256xi1>
    %14 = arith.xori %10, %13 : vector<1x256xi1>
    %15 = arith.andi %14, %8 : vector<1x256xi1>
    %16 = vector.broadcast %4 : i32 to vector<1x256xi32>
    %17 = arith.addi %6, %16 : vector<1x256xi32>
    %18 = arith.select %15, %17, %6 : vector<1x256xi1>, vector<1x256xi32>
    %c0_i32_5 = arith.constant 0 : i32
    %19 = vector.broadcast %c0_i32_5 : i32 to vector<1x256xi32>
    %20 = arith.cmpi ne, %18, %19 : vector<1x256xi32>
    %c15_i32 = arith.constant 15 : i32
    %21 = vector.broadcast %c15_i32 : i32 to vector<1x256xi32>
    %22 = arith.cmpi ne, %18, %21 : vector<1x256xi32>
    %c0_6 = arith.constant 0 : index
    %c0_7 = arith.constant 0 : index
    %c0_8 = arith.constant 0 : index
    %23 = vector.load %arg4[%c0_6, %c0_7, %c0_8] : memref<4x4x1xf32, #tpu.memory_space<vmem>>, vector<1x4x1xf32>
    %24 = vector.shape_cast %23 : vector<1x4x1xf32> to vector<4x1xf32>
    %c1 = arith.constant 1 : index
    %c0_9 = arith.constant 0 : index
    %c0_10 = arith.constant 0 : index
    %25 = vector.load %arg4[%c1, %c0_9, %c0_10] : memref<4x4x1xf32, #tpu.memory_space<vmem>>, vector<1x4x1xf32>
    %26 = vector.shape_cast %25 : vector<1x4x1xf32> to vector<4x1xf32>
    %c2 = arith.constant 2 : index
    %c0_11 = arith.constant 0 : index
    %c0_12 = arith.constant 0 : index
    %27 = vector.load %arg4[%c2, %c0_11, %c0_12] : memref<4x4x1xf32, #tpu.memory_space<vmem>>, vector<1x4x1xf32>
    %28 = vector.shape_cast %27 : vector<1x4x1xf32> to vector<4x1xf32>
    %c3 = arith.constant 3 : index
    %c0_13 = arith.constant 0 : index
    %c0_14 = arith.constant 0 : index
    %29 = vector.load %arg4[%c3, %c0_13, %c0_14] : memref<4x4x1xf32, #tpu.memory_space<vmem>>, vector<1x4x1xf32>
    %30 = vector.shape_cast %29 : vector<1x4x1xf32> to vector<4x1xf32>
    %cst = arith.constant 0.000000e+00 : f32
    %31 = vector.broadcast %cst : f32 to vector<4x17xf32>
    %32 = tpu.concatenate %31, %1, %31 in 1 : vector<4x17xf32>, vector<4x256xf32>, vector<4x17xf32> -> vector<4x290xf32>
    %cst_15 = arith.constant 0.000000e+00 : f32
    %33 = vector.broadcast %cst_15 : f32 to vector<4x256xf32>
    %34 = vector.extract_strided_slice %32 {offsets = [0, 0], sizes = [4, 256], strides = [1, 1]} : vector<4x290xf32> to vector<4x256xf32>
    %cst_16 = arith.constant 0.000000e+00 : f32
    %35 = vector.shape_cast %20 : vector<1x256xi1> to vector<1x256xi1>
    %36 = vector.broadcast %35 : vector<1x256xi1> to vector<4x256xi1>
    %37 = vector.broadcast %cst_16 : f32 to vector<4x256xf32>
    %38 = arith.select %36, %34, %37 : vector<4x256xi1>, vector<4x256xf32>
    %c0_17 = arith.constant 0 : index
    %c0_18 = arith.constant 0 : index
    %c0_19 = arith.constant 0 : index
    %39 = vector.load %arg2[%c0_17, %c0_18, %c0_19] : memref<9x4x4xf32, #tpu.memory_space<vmem>>, vector<1x4x4xf32>
    %40 = vector.shape_cast %39 : vector<1x4x4xf32> to vector<4x4xf32>
    %cst_20 = arith.constant dense<0.000000e+00> : vector<4x256xf32>
    %41 = tpu.matmul %40, %38, %cst_20 {dimension_numbers = #tpu.dot_dimension_numbers<[1], [0], [0], [1], [0, 0, 1, 1], [], []>} : vector<4x4xf32>, vector<4x256xf32>, vector<4x256xf32> -> vector<4x256xf32>
    %42 = arith.addf %33, %41 : vector<4x256xf32>
    %43 = vector.extract_strided_slice %32 {offsets = [0, 1], sizes = [4, 256], strides = [1, 1]} : vector<4x290xf32> to vector<4x256xf32>
    %c1_21 = arith.constant 1 : index
    %c0_22 = arith.constant 0 : index
    %c0_23 = arith.constant 0 : index
    %44 = vector.load %arg2[%c1_21, %c0_22, %c0_23] : memref<9x4x4xf32, #tpu.memory_space<vmem>>, vector<1x4x4xf32>
    %45 = vector.shape_cast %44 : vector<1x4x4xf32> to vector<4x4xf32>
    %cst_24 = arith.constant dense<0.000000e+00> : vector<4x256xf32>
    %46 = tpu.matmul %45, %43, %cst_24 {dimension_numbers = #tpu.dot_dimension_numbers<[1], [0], [0], [1], [0, 0, 1, 1], [], []>} : vector<4x4xf32>, vector<4x256xf32>, vector<4x256xf32> -> vector<4x256xf32>
    %47 = arith.addf %42, %46 : vector<4x256xf32>
    %48 = vector.extract_strided_slice %32 {offsets = [0, 2], sizes = [4, 256], strides = [1, 1]} : vector<4x290xf32> to vector<4x256xf32>
    %cst_25 = arith.constant 0.000000e+00 : f32
    %49 = vector.shape_cast %22 : vector<1x256xi1> to vector<1x256xi1>
    %50 = vector.broadcast %49 : vector<1x256xi1> to vector<4x256xi1>
    %51 = vector.broadcast %cst_25 : f32 to vector<4x256xf32>
    %52 = arith.select %50, %48, %51 : vector<4x256xi1>, vector<4x256xf32>
    %c2_26 = arith.constant 2 : index
    %c0_27 = arith.constant 0 : index
    %c0_28 = arith.constant 0 : index
    %53 = vector.load %arg2[%c2_26, %c0_27, %c0_28] : memref<9x4x4xf32, #tpu.memory_space<vmem>>, vector<1x4x4xf32>
    %54 = vector.shape_cast %53 : vector<1x4x4xf32> to vector<4x4xf32>
    %cst_29 = arith.constant dense<0.000000e+00> : vector<4x256xf32>
    %55 = tpu.matmul %54, %52, %cst_29 {dimension_numbers = #tpu.dot_dimension_numbers<[1], [0], [0], [1], [0, 0, 1, 1], [], []>} : vector<4x4xf32>, vector<4x256xf32>, vector<4x256xf32> -> vector<4x256xf32>
    %56 = arith.addf %47, %55 : vector<4x256xf32>
    %57 = vector.extract_strided_slice %32 {offsets = [0, 16], sizes = [4, 256], strides = [1, 1]} : vector<4x290xf32> to vector<4x256xf32>
    %cst_30 = arith.constant 0.000000e+00 : f32
    %58 = vector.shape_cast %20 : vector<1x256xi1> to vector<1x256xi1>
    %59 = vector.broadcast %58 : vector<1x256xi1> to vector<4x256xi1>
    %60 = vector.broadcast %cst_30 : f32 to vector<4x256xf32>
    %61 = arith.select %59, %57, %60 : vector<4x256xi1>, vector<4x256xf32>
    %c3_31 = arith.constant 3 : index
    %c0_32 = arith.constant 0 : index
    %c0_33 = arith.constant 0 : index
    %62 = vector.load %arg2[%c3_31, %c0_32, %c0_33] : memref<9x4x4xf32, #tpu.memory_space<vmem>>, vector<1x4x4xf32>
    %63 = vector.shape_cast %62 : vector<1x4x4xf32> to vector<4x4xf32>
    %cst_34 = arith.constant dense<0.000000e+00> : vector<4x256xf32>
    %64 = tpu.matmul %63, %61, %cst_34 {dimension_numbers = #tpu.dot_dimension_numbers<[1], [0], [0], [1], [0, 0, 1, 1], [], []>} : vector<4x4xf32>, vector<4x256xf32>, vector<4x256xf32> -> vector<4x256xf32>
    %65 = arith.addf %56, %64 : vector<4x256xf32>
    %66 = vector.extract_strided_slice %32 {offsets = [0, 17], sizes = [4, 256], strides = [1, 1]} : vector<4x290xf32> to vector<4x256xf32>
    %c4 = arith.constant 4 : index
    %c0_35 = arith.constant 0 : index
    %c0_36 = arith.constant 0 : index
    %67 = vector.load %arg2[%c4, %c0_35, %c0_36] : memref<9x4x4xf32, #tpu.memory_space<vmem>>, vector<1x4x4xf32>
    %68 = vector.shape_cast %67 : vector<1x4x4xf32> to vector<4x4xf32>
    %cst_37 = arith.constant dense<0.000000e+00> : vector<4x256xf32>
    %69 = tpu.matmul %68, %66, %cst_37 {dimension_numbers = #tpu.dot_dimension_numbers<[1], [0], [0], [1], [0, 0, 1, 1], [], []>} : vector<4x4xf32>, vector<4x256xf32>, vector<4x256xf32> -> vector<4x256xf32>
    %70 = arith.addf %65, %69 : vector<4x256xf32>
    %71 = vector.extract_strided_slice %32 {offsets = [0, 18], sizes = [4, 256], strides = [1, 1]} : vector<4x290xf32> to vector<4x256xf32>
    %cst_38 = arith.constant 0.000000e+00 : f32
    %72 = vector.shape_cast %22 : vector<1x256xi1> to vector<1x256xi1>
    %73 = vector.broadcast %72 : vector<1x256xi1> to vector<4x256xi1>
    %74 = vector.broadcast %cst_38 : f32 to vector<4x256xf32>
    %75 = arith.select %73, %71, %74 : vector<4x256xi1>, vector<4x256xf32>
    %c5 = arith.constant 5 : index
    %c0_39 = arith.constant 0 : index
    %c0_40 = arith.constant 0 : index
    %76 = vector.load %arg2[%c5, %c0_39, %c0_40] : memref<9x4x4xf32, #tpu.memory_space<vmem>>, vector<1x4x4xf32>
    %77 = vector.shape_cast %76 : vector<1x4x4xf32> to vector<4x4xf32>
    %cst_41 = arith.constant dense<0.000000e+00> : vector<4x256xf32>
    %78 = tpu.matmul %77, %75, %cst_41 {dimension_numbers = #tpu.dot_dimension_numbers<[1], [0], [0], [1], [0, 0, 1, 1], [], []>} : vector<4x4xf32>, vector<4x256xf32>, vector<4x256xf32> -> vector<4x256xf32>
    %79 = arith.addf %70, %78 : vector<4x256xf32>
    %80 = vector.extract_strided_slice %32 {offsets = [0, 32], sizes = [4, 256], strides = [1, 1]} : vector<4x290xf32> to vector<4x256xf32>
    %cst_42 = arith.constant 0.000000e+00 : f32
    %81 = vector.shape_cast %20 : vector<1x256xi1> to vector<1x256xi1>
    %82 = vector.broadcast %81 : vector<1x256xi1> to vector<4x256xi1>
    %83 = vector.broadcast %cst_42 : f32 to vector<4x256xf32>
    %84 = arith.select %82, %80, %83 : vector<4x256xi1>, vector<4x256xf32>
    %c6 = arith.constant 6 : index
    %c0_43 = arith.constant 0 : index
    %c0_44 = arith.constant 0 : index
    %85 = vector.load %arg2[%c6, %c0_43, %c0_44] : memref<9x4x4xf32, #tpu.memory_space<vmem>>, vector<1x4x4xf32>
    %86 = vector.shape_cast %85 : vector<1x4x4xf32> to vector<4x4xf32>
    %cst_45 = arith.constant dense<0.000000e+00> : vector<4x256xf32>
    %87 = tpu.matmul %86, %84, %cst_45 {dimension_numbers = #tpu.dot_dimension_numbers<[1], [0], [0], [1], [0, 0, 1, 1], [], []>} : vector<4x4xf32>, vector<4x256xf32>, vector<4x256xf32> -> vector<4x256xf32>
    %88 = arith.addf %79, %87 : vector<4x256xf32>
    %89 = vector.extract_strided_slice %32 {offsets = [0, 33], sizes = [4, 256], strides = [1, 1]} : vector<4x290xf32> to vector<4x256xf32>
    %c7 = arith.constant 7 : index
    %c0_46 = arith.constant 0 : index
    %c0_47 = arith.constant 0 : index
    %90 = vector.load %arg2[%c7, %c0_46, %c0_47] : memref<9x4x4xf32, #tpu.memory_space<vmem>>, vector<1x4x4xf32>
    %91 = vector.shape_cast %90 : vector<1x4x4xf32> to vector<4x4xf32>
    %cst_48 = arith.constant dense<0.000000e+00> : vector<4x256xf32>
    %92 = tpu.matmul %91, %89, %cst_48 {dimension_numbers = #tpu.dot_dimension_numbers<[1], [0], [0], [1], [0, 0, 1, 1], [], []>} : vector<4x4xf32>, vector<4x256xf32>, vector<4x256xf32> -> vector<4x256xf32>
    %93 = arith.addf %88, %92 : vector<4x256xf32>
    %94 = vector.extract_strided_slice %32 {offsets = [0, 34], sizes = [4, 256], strides = [1, 1]} : vector<4x290xf32> to vector<4x256xf32>
    %cst_49 = arith.constant 0.000000e+00 : f32
    %95 = vector.shape_cast %22 : vector<1x256xi1> to vector<1x256xi1>
    %96 = vector.broadcast %95 : vector<1x256xi1> to vector<4x256xi1>
    %97 = vector.broadcast %cst_49 : f32 to vector<4x256xf32>
    %98 = arith.select %96, %94, %97 : vector<4x256xi1>, vector<4x256xf32>
    %c8 = arith.constant 8 : index
    %c0_50 = arith.constant 0 : index
    %c0_51 = arith.constant 0 : index
    %99 = vector.load %arg2[%c8, %c0_50, %c0_51] : memref<9x4x4xf32, #tpu.memory_space<vmem>>, vector<1x4x4xf32>
    %100 = vector.shape_cast %99 : vector<1x4x4xf32> to vector<4x4xf32>
    %cst_52 = arith.constant dense<0.000000e+00> : vector<4x256xf32>
    %101 = tpu.matmul %100, %98, %cst_52 {dimension_numbers = #tpu.dot_dimension_numbers<[1], [0], [0], [1], [0, 0, 1, 1], [], []>} : vector<4x4xf32>, vector<4x256xf32>, vector<4x256xf32> -> vector<4x256xf32>
    %102 = arith.addf %93, %101 : vector<4x256xf32>
    %103 = vector.broadcast %24 : vector<4x1xf32> to vector<4x256xf32>
    %104 = arith.mulf %102, %103 : vector<4x256xf32>
    %105 = vector.broadcast %26 : vector<4x1xf32> to vector<4x256xf32>
    %106 = arith.addf %104, %105 : vector<4x256xf32>
    %cst_53 = arith.constant 0.000000e+00 : f32
    %107 = vector.broadcast %cst_53 : f32 to vector<4x256xf32>
    %108 = arith.maximumf %106, %107 : vector<4x256xf32>
    %cst_54 = arith.constant 0.000000e+00 : f32
    %109 = vector.broadcast %cst_54 : f32 to vector<4x17xf32>
    %110 = tpu.concatenate %109, %108, %109 in 1 : vector<4x17xf32>, vector<4x256xf32>, vector<4x17xf32> -> vector<4x290xf32>
    %cst_55 = arith.constant 0.000000e+00 : f32
    %111 = vector.broadcast %cst_55 : f32 to vector<4x256xf32>
    %112 = vector.extract_strided_slice %110 {offsets = [0, 0], sizes = [4, 256], strides = [1, 1]} : vector<4x290xf32> to vector<4x256xf32>
    %cst_56 = arith.constant 0.000000e+00 : f32
    %113 = vector.shape_cast %20 : vector<1x256xi1> to vector<1x256xi1>
    %114 = vector.broadcast %113 : vector<1x256xi1> to vector<4x256xi1>
    %115 = vector.broadcast %cst_56 : f32 to vector<4x256xf32>
    %116 = arith.select %114, %112, %115 : vector<4x256xi1>, vector<4x256xf32>
    %c0_57 = arith.constant 0 : index
    %c0_58 = arith.constant 0 : index
    %c0_59 = arith.constant 0 : index
    %117 = vector.load %arg3[%c0_57, %c0_58, %c0_59] : memref<9x4x4xf32, #tpu.memory_space<vmem>>, vector<1x4x4xf32>
    %118 = vector.shape_cast %117 : vector<1x4x4xf32> to vector<4x4xf32>
    %cst_60 = arith.constant dense<0.000000e+00> : vector<4x256xf32>
    %119 = tpu.matmul %118, %116, %cst_60 {dimension_numbers = #tpu.dot_dimension_numbers<[1], [0], [0], [1], [0, 0, 1, 1], [], []>} : vector<4x4xf32>, vector<4x256xf32>, vector<4x256xf32> -> vector<4x256xf32>
    %120 = arith.addf %111, %119 : vector<4x256xf32>
    %121 = vector.extract_strided_slice %110 {offsets = [0, 1], sizes = [4, 256], strides = [1, 1]} : vector<4x290xf32> to vector<4x256xf32>
    %c1_61 = arith.constant 1 : index
    %c0_62 = arith.constant 0 : index
    %c0_63 = arith.constant 0 : index
    %122 = vector.load %arg3[%c1_61, %c0_62, %c0_63] : memref<9x4x4xf32, #tpu.memory_space<vmem>>, vector<1x4x4xf32>
    %123 = vector.shape_cast %122 : vector<1x4x4xf32> to vector<4x4xf32>
    %cst_64 = arith.constant dense<0.000000e+00> : vector<4x256xf32>
    %124 = tpu.matmul %123, %121, %cst_64 {dimension_numbers = #tpu.dot_dimension_numbers<[1], [0], [0], [1], [0, 0, 1, 1], [], []>} : vector<4x4xf32>, vector<4x256xf32>, vector<4x256xf32> -> vector<4x256xf32>
    %125 = arith.addf %120, %124 : vector<4x256xf32>
    %126 = vector.extract_strided_slice %110 {offsets = [0, 2], sizes = [4, 256], strides = [1, 1]} : vector<4x290xf32> to vector<4x256xf32>
    %cst_65 = arith.constant 0.000000e+00 : f32
    %127 = vector.shape_cast %22 : vector<1x256xi1> to vector<1x256xi1>
    %128 = vector.broadcast %127 : vector<1x256xi1> to vector<4x256xi1>
    %129 = vector.broadcast %cst_65 : f32 to vector<4x256xf32>
    %130 = arith.select %128, %126, %129 : vector<4x256xi1>, vector<4x256xf32>
    %c2_66 = arith.constant 2 : index
    %c0_67 = arith.constant 0 : index
    %c0_68 = arith.constant 0 : index
    %131 = vector.load %arg3[%c2_66, %c0_67, %c0_68] : memref<9x4x4xf32, #tpu.memory_space<vmem>>, vector<1x4x4xf32>
    %132 = vector.shape_cast %131 : vector<1x4x4xf32> to vector<4x4xf32>
    %cst_69 = arith.constant dense<0.000000e+00> : vector<4x256xf32>
    %133 = tpu.matmul %132, %130, %cst_69 {dimension_numbers = #tpu.dot_dimension_numbers<[1], [0], [0], [1], [0, 0, 1, 1], [], []>} : vector<4x4xf32>, vector<4x256xf32>, vector<4x256xf32> -> vector<4x256xf32>
    %134 = arith.addf %125, %133 : vector<4x256xf32>
    %135 = vector.extract_strided_slice %110 {offsets = [0, 16], sizes = [4, 256], strides = [1, 1]} : vector<4x290xf32> to vector<4x256xf32>
    %cst_70 = arith.constant 0.000000e+00 : f32
    %136 = vector.shape_cast %20 : vector<1x256xi1> to vector<1x256xi1>
    %137 = vector.broadcast %136 : vector<1x256xi1> to vector<4x256xi1>
    %138 = vector.broadcast %cst_70 : f32 to vector<4x256xf32>
    %139 = arith.select %137, %135, %138 : vector<4x256xi1>, vector<4x256xf32>
    %c3_71 = arith.constant 3 : index
    %c0_72 = arith.constant 0 : index
    %c0_73 = arith.constant 0 : index
    %140 = vector.load %arg3[%c3_71, %c0_72, %c0_73] : memref<9x4x4xf32, #tpu.memory_space<vmem>>, vector<1x4x4xf32>
    %141 = vector.shape_cast %140 : vector<1x4x4xf32> to vector<4x4xf32>
    %cst_74 = arith.constant dense<0.000000e+00> : vector<4x256xf32>
    %142 = tpu.matmul %141, %139, %cst_74 {dimension_numbers = #tpu.dot_dimension_numbers<[1], [0], [0], [1], [0, 0, 1, 1], [], []>} : vector<4x4xf32>, vector<4x256xf32>, vector<4x256xf32> -> vector<4x256xf32>
    %143 = arith.addf %134, %142 : vector<4x256xf32>
    %144 = vector.extract_strided_slice %110 {offsets = [0, 17], sizes = [4, 256], strides = [1, 1]} : vector<4x290xf32> to vector<4x256xf32>
    %c4_75 = arith.constant 4 : index
    %c0_76 = arith.constant 0 : index
    %c0_77 = arith.constant 0 : index
    %145 = vector.load %arg3[%c4_75, %c0_76, %c0_77] : memref<9x4x4xf32, #tpu.memory_space<vmem>>, vector<1x4x4xf32>
    %146 = vector.shape_cast %145 : vector<1x4x4xf32> to vector<4x4xf32>
    %cst_78 = arith.constant dense<0.000000e+00> : vector<4x256xf32>
    %147 = tpu.matmul %146, %144, %cst_78 {dimension_numbers = #tpu.dot_dimension_numbers<[1], [0], [0], [1], [0, 0, 1, 1], [], []>} : vector<4x4xf32>, vector<4x256xf32>, vector<4x256xf32> -> vector<4x256xf32>
    %148 = arith.addf %143, %147 : vector<4x256xf32>
    %149 = vector.extract_strided_slice %110 {offsets = [0, 18], sizes = [4, 256], strides = [1, 1]} : vector<4x290xf32> to vector<4x256xf32>
    %cst_79 = arith.constant 0.000000e+00 : f32
    %150 = vector.shape_cast %22 : vector<1x256xi1> to vector<1x256xi1>
    %151 = vector.broadcast %150 : vector<1x256xi1> to vector<4x256xi1>
    %152 = vector.broadcast %cst_79 : f32 to vector<4x256xf32>
    %153 = arith.select %151, %149, %152 : vector<4x256xi1>, vector<4x256xf32>
    %c5_80 = arith.constant 5 : index
    %c0_81 = arith.constant 0 : index
    %c0_82 = arith.constant 0 : index
    %154 = vector.load %arg3[%c5_80, %c0_81, %c0_82] : memref<9x4x4xf32, #tpu.memory_space<vmem>>, vector<1x4x4xf32>
    %155 = vector.shape_cast %154 : vector<1x4x4xf32> to vector<4x4xf32>
    %cst_83 = arith.constant dense<0.000000e+00> : vector<4x256xf32>
    %156 = tpu.matmul %155, %153, %cst_83 {dimension_numbers = #tpu.dot_dimension_numbers<[1], [0], [0], [1], [0, 0, 1, 1], [], []>} : vector<4x4xf32>, vector<4x256xf32>, vector<4x256xf32> -> vector<4x256xf32>
    %157 = arith.addf %148, %156 : vector<4x256xf32>
    %158 = vector.extract_strided_slice %110 {offsets = [0, 32], sizes = [4, 256], strides = [1, 1]} : vector<4x290xf32> to vector<4x256xf32>
    %cst_84 = arith.constant 0.000000e+00 : f32
    %159 = vector.shape_cast %20 : vector<1x256xi1> to vector<1x256xi1>
    %160 = vector.broadcast %159 : vector<1x256xi1> to vector<4x256xi1>
    %161 = vector.broadcast %cst_84 : f32 to vector<4x256xf32>
    %162 = arith.select %160, %158, %161 : vector<4x256xi1>, vector<4x256xf32>
    %c6_85 = arith.constant 6 : index
    %c0_86 = arith.constant 0 : index
    %c0_87 = arith.constant 0 : index
    %163 = vector.load %arg3[%c6_85, %c0_86, %c0_87] : memref<9x4x4xf32, #tpu.memory_space<vmem>>, vector<1x4x4xf32>
    %164 = vector.shape_cast %163 : vector<1x4x4xf32> to vector<4x4xf32>
    %cst_88 = arith.constant dense<0.000000e+00> : vector<4x256xf32>
    %165 = tpu.matmul %164, %162, %cst_88 {dimension_numbers = #tpu.dot_dimension_numbers<[1], [0], [0], [1], [0, 0, 1, 1], [], []>} : vector<4x4xf32>, vector<4x256xf32>, vector<4x256xf32> -> vector<4x256xf32>
    %166 = arith.addf %157, %165 : vector<4x256xf32>
    %167 = vector.extract_strided_slice %110 {offsets = [0, 33], sizes = [4, 256], strides = [1, 1]} : vector<4x290xf32> to vector<4x256xf32>
    %c7_89 = arith.constant 7 : index
    %c0_90 = arith.constant 0 : index
    %c0_91 = arith.constant 0 : index
    %168 = vector.load %arg3[%c7_89, %c0_90, %c0_91] : memref<9x4x4xf32, #tpu.memory_space<vmem>>, vector<1x4x4xf32>
    %169 = vector.shape_cast %168 : vector<1x4x4xf32> to vector<4x4xf32>
    %cst_92 = arith.constant dense<0.000000e+00> : vector<4x256xf32>
    %170 = tpu.matmul %169, %167, %cst_92 {dimension_numbers = #tpu.dot_dimension_numbers<[1], [0], [0], [1], [0, 0, 1, 1], [], []>} : vector<4x4xf32>, vector<4x256xf32>, vector<4x256xf32> -> vector<4x256xf32>
    %171 = arith.addf %166, %170 : vector<4x256xf32>
    %172 = vector.extract_strided_slice %110 {offsets = [0, 34], sizes = [4, 256], strides = [1, 1]} : vector<4x290xf32> to vector<4x256xf32>
    %cst_93 = arith.constant 0.000000e+00 : f32
    %173 = vector.shape_cast %22 : vector<1x256xi1> to vector<1x256xi1>
    %174 = vector.broadcast %173 : vector<1x256xi1> to vector<4x256xi1>
    %175 = vector.broadcast %cst_93 : f32 to vector<4x256xf32>
    %176 = arith.select %174, %172, %175 : vector<4x256xi1>, vector<4x256xf32>
    %c8_94 = arith.constant 8 : index
    %c0_95 = arith.constant 0 : index
    %c0_96 = arith.constant 0 : index
    %177 = vector.load %arg3[%c8_94, %c0_95, %c0_96] : memref<9x4x4xf32, #tpu.memory_space<vmem>>, vector<1x4x4xf32>
    %178 = vector.shape_cast %177 : vector<1x4x4xf32> to vector<4x4xf32>
    %cst_97 = arith.constant dense<0.000000e+00> : vector<4x256xf32>
    %179 = tpu.matmul %178, %176, %cst_97 {dimension_numbers = #tpu.dot_dimension_numbers<[1], [0], [0], [1], [0, 0, 1, 1], [], []>} : vector<4x4xf32>, vector<4x256xf32>, vector<4x256xf32> -> vector<4x256xf32>
    %180 = arith.addf %171, %179 : vector<4x256xf32>
    %181 = vector.broadcast %28 : vector<4x1xf32> to vector<4x256xf32>
    %182 = arith.mulf %180, %181 : vector<4x256xf32>
    %183 = vector.broadcast %30 : vector<4x1xf32> to vector<4x256xf32>
    %184 = arith.addf %182, %183 : vector<4x256xf32>
    %185 = arith.addf %184, %1 : vector<4x256xf32>
    %cst_98 = arith.constant 0.000000e+00 : f32
    %186 = vector.broadcast %cst_98 : f32 to vector<4x256xf32>
    %187 = arith.maximumf %185, %186 : vector<4x256xf32>
    %c0_99 = arith.constant 0 : index
    %c0_100 = arith.constant 0 : index
    %c0_101 = arith.constant 0 : index
    %188 = vector.load %arg5[%c0_99, %c0_100, %c0_101] : memref<1x4x256xf32, #tpu.memory_space<vmem>>, vector<1x4x256xf32>
    %189 = vector.shape_cast %188 : vector<1x4x256xf32> to vector<4x256xf32>
    %190 = vector.shape_cast %187 : vector<4x256xf32> to vector<1x4x256xf32>
    tpu.vector_store %arg5[%c0_99, %c0_100, %c0_101], %190 {strides = array<i32>} : memref<1x4x256xf32, #tpu.memory_space<vmem>>, vector<1x4x256xf32>,
    return
  }
  func.func @transform_0(%arg0: i32) -> (i32, i32, i32) {
    %c0_i32 = arith.constant 0 : i32
    %c0_i32_0 = arith.constant 0 : i32
    %c0_i32_1 = arith.constant 0 : i32
    return %arg0, %c0_i32, %c0_i32_0 : i32, i32, i32
  }
  func.func @transform_1(%arg0: i32) -> (i32, i32, i32) {
    %c0_i32 = arith.constant 0 : i32
    %c0_i32_0 = arith.constant 0 : i32
    %c0_i32_1 = arith.constant 0 : i32
    %c0_i32_2 = arith.constant 0 : i32
    return %c0_i32, %c0_i32_0, %c0_i32_1 : i32, i32, i32
  }
  func.func @transform_2(%arg0: i32) -> (i32, i32, i32) {
    %c0_i32 = arith.constant 0 : i32
    %c0_i32_0 = arith.constant 0 : i32
    %c0_i32_1 = arith.constant 0 : i32
    %c0_i32_2 = arith.constant 0 : i32
    return %c0_i32, %c0_i32_0, %c0_i32_1 : i32, i32, i32
  }
  func.func @transform_3(%arg0: i32) -> (i32, i32, i32) {
    %c0_i32 = arith.constant 0 : i32
    %c0_i32_0 = arith.constant 0 : i32
    %c0_i32_1 = arith.constant 0 : i32
    %c0_i32_2 = arith.constant 0 : i32
    return %c0_i32, %c0_i32_0, %c0_i32_1 : i32, i32, i32
  }
  func.func @transform_4(%arg0: i32) -> (i32, i32, i32) {
    %c0_i32 = arith.constant 0 : i32
    %c0_i32_0 = arith.constant 0 : i32
    %c0_i32_1 = arith.constant 0 : i32
    return %arg0, %c0_i32, %c0_i32_0 : i32, i32, i32
  }
}

</mosaic_0001>

<llo_original>
// kernel: tpu_custom_call.1
$region0: #{tpu_custom_call.1}
  #allocation0 [shape = 'u32[]', space=smem, size = 0x4, offset = 0x4, fixed_abs, tag = 'smem constant byte address 0x4 - core index']
  #allocation1 [shape = 'u32[144,128]{1,0:T(1,128)}', space=vmem, size = 0x12000, scoped, tag = 'internal scratch']
  %s0 = inlined_call_operand.vmem [shape: f32[2,4,256], index: 0, kind: input, shape index: {}]
  %s1 = inlined_call_operand.vmem [shape: f32[9,4,4], index: 1, kind: input, shape index: {}]
  %s2 = inlined_call_operand.vmem [shape: f32[9,4,4], index: 2, kind: input, shape index: {}]
  %s3 = inlined_call_operand.vmem [shape: f32[4,4,1], index: 3, kind: input, shape index: {}]
  %s4 = inlined_call_operand.hbm [shape: f32[2,4,256], index: 4, kind: output, shape index: {}]
  %s5 = sld [smem:[#allocation0]]
  $region49: #{tpu_custom_call.1} parent=0
    _
  %s7 = ssub.s32 1, %s5
  %s8 = scalar_select 0, %s7, %s5
  $region1: #{tpu_custom_call.1} parent=0
    #allocation2 [shape = 'u8[8192]{0}', space=vmem, size = 0x2000, scoped, tag = 'output window, operand 0']
    #allocation3 [shape = 's32[2]{0}', space=sflag, size = 0x8, scoped, tag = 'scoped memory for tpu_custom_call.1']
    %9 = vsyncpa [#allocation3], 0
    %s10 = scalar_lea.sflag [#allocation3], 1
    %11 = vsyncpa %s10, 0
    loop: start=0, step=1, limit=4
    $region2: #{tpu_custom_call.1} parent=1 // loop_pre_header
      _
    $region3: #{tpu_custom_call.1} parent=1 // loop_header
      %s13 = sphi 0, %s17
      %p14 = scmp.ge.s32.totalorder %s13, 4
      %s23 = sphi 0, %s25
      %s26 = sphi 0, %s23
      %s27 = sphi 0, %s26
      %s43 = sphi 0, %s27
      %s47 = sphi 0, %s47
      %s49 = sphi 0, %s47
      %s50 = sphi 0, %s49
      %s64 = sphi 0, %s50
      %s68 = sphi 0, %s68
      %s70 = sphi 0, %s68
      %s71 = sphi 0, %s70
      %s85 = sphi 0, %s71
      %s89 = sphi 0, %s89
      %s91 = sphi 0, %s89
      %s92 = sphi 0, %s91
      %s106 = sphi 0, %s92
      %s112 = sphi 0, %s114
      %s115 = sphi 0, %s112
      %s116 = sphi 0, %s115
      %s132 = sphi 0, %s116
    $region4: #{tpu_custom_call.1} parent=1 // loop_header_branch
      %16 = sbr.rel (%p14) target = $region8
    $region5: #{tpu_custom_call.1} parent=1 // loop_body
      %s18 = ssub.s32 %s13, 1
      %s19 = ssub.s32 %s13, 2
      %s20 = sadd.s32 %s13, 1
      %s21 = ssub.s32 %s13, %s20
      %p22 = scmp.eq.s32.totalorder %s21, 0
      %s24 = sadd.s32 %s23, 1
      %s25 = scalar_select %p22, %s23, %s24
      %p28 = pneg %p22
      %p29 = scmp.eq.s32.totalorder %s13, 1
      %p30 = por %p28, %p29
      %p31 = scmp.ne.s32.totalorder %s23, %s26
      %p32 = scmp.eq.s32.totalorder %s13, 0
      %p33 = por %p31, %p32
      %p34 = scmp.ne.s32.totalorder %s23, %s26
      %p35 = scmp.eq.s32.totalorder %s18, 1
      %p36 = por %p34, %p35
      %p37 = scmp.ne.s32.totalorder %s26, %s27
      %p38 = scmp.eq.s32.totalorder %s18, 0
      %p39 = por %p37, %p38
      %p40 = scmp.ne.s32.totalorder %s26, %s27
      %p41 = scmp.eq.s32.totalorder %s19, 1
      %p42 = por %p40, %p41
      %p44 = scmp.ne.s32.totalorder %s27, %s43
      %p45 = scmp.eq.s32.totalorder %s19, 0
      %p46 = por %p44, %p45
      %s48 = sadd.s32 %s47, 1
      %p51 = scmp.eq.s32.totalorder %s13, 1
      %p52 = scmp.ne.s32.totalorder %s47, %s49
      %p53 = scmp.eq.s32.totalorder %s13, 0
      %p54 = por %p52, %p53
      %p55 = scmp.ne.s32.totalorder %s47, %s49
      %p56 = scmp.eq.s32.totalorder %s18, 1
      %p57 = por %p55, %p56
      %p58 = scmp.ne.s32.totalorder %s49, %s50
      %p59 = scmp.eq.s32.totalorder %s18, 0
      %p60 = por %p58, %p59
      %p61 = scmp.ne.s32.totalorder %s49, %s50
      %p62 = scmp.eq.s32.totalorder %s19, 1
      %p63 = por %p61, %p62
      %p65 = scmp.ne.s32.totalorder %s50, %s64
      %p66 = scmp.eq.s32.totalorder %s19, 0
      %p67 = por %p65, %p66
      %s69 = sadd.s32 %s68, 1
      %p72 = scmp.eq.s32.totalorder %s13, 1
      %p73 = scmp.ne.s32.totalorder %s68, %s70
      %p74 = scmp.eq.s32.totalorder %s13, 0
      %p75 = por %p73, %p74
      %p76 = scmp.ne.s32.totalorder %s68, %s70
      %p77 = scmp.eq.s32.totalorder %s18, 1
      %p78 = por %p76, %p77
      %p79 = scmp.ne.s32.totalorder %s70, %s71
      %p80 = scmp.eq.s32.totalorder %s18, 0
      %p81 = por %p79, %p80
      %p82 = scmp.ne.s32.totalorder %s70, %s71
      %p83 = scmp.eq.s32.totalorder %s19, 1
      %p84 = por %p82, %p83
      %p86 = scmp.ne.s32.totalorder %s71, %s85
      %p87 = scmp.eq.s32.totalorder %s19, 0
      %p88 = por %p86, %p87
      %s90 = sadd.s32 %s89, 1
      %p93 = scmp.eq.s32.totalorder %s13, 1
      %p94 = scmp.ne.s32.totalorder %s89, %s91
      %p95 = scmp.eq.s32.totalorder %s13, 0
      %p96 = por %p94, %p95
      %p97 = scmp.ne.s32.totalorder %s89, %s91
      %p98 = scmp.eq.s32.totalorder %s18, 1
      %p99 = por %p97, %p98
      %p100 = scmp.ne.s32.totalorder %s91, %s92
      %p101 = scmp.eq.s32.totalorder %s18, 0
      %p102 = por %p100, %p101
      %p103 = scmp.ne.s32.totalorder %s91, %s92
      %p104 = scmp.eq.s32.totalorder %s19, 1
      %p105 = por %p103, %p104
      %p107 = scmp.ne.s32.totalorder %s92, %s106
      %p108 = scmp.eq.s32.totalorder %s19, 0
      %p109 = por %p107, %p108
      %s110 = ssub.s32 %s13, %s20
      %p111 = scmp.eq.s32.totalorder %s110, 0
      %s113 = sadd.s32 %s112, 1
      %s114 = scalar_select %p111, %s112, %s113
      %p117 = pneg %p111
      %p118 = scmp.eq.s32.totalorder %s13, 1
      %p119 = por %p117, %p118
      %p120 = scmp.ne.s32.totalorder %s112, %s115
      %p121 = scmp.eq.s32.totalorder %s13, 0
      %p122 = por %p120, %p121
      %p123 = scmp.ne.s32.totalorder %s112, %s115
      %p124 = scmp.eq.s32.totalorder %s18, 1
      %p125 = por %p123, %p124
      %p126 = scmp.ne.s32.totalorder %s115, %s116
      %p127 = scmp.eq.s32.totalorder %s18, 0
      %p128 = por %p126, %p127
      %p129 = scmp.ne.s32.totalorder %s115, %s116
      %p130 = scmp.eq.s32.totalorder %s19, 1
      %p131 = por %p129, %p130
      %p133 = scmp.ne.s32.totalorder %s116, %s132
      %p134 = scmp.eq.s32.totalorder %s19, 0
      %p135 = por %p133, %p134
      %p136 = scmp.le.s32.totalorder 1, %s13
      %p137 = scmp.lt.s32.totalorder %s13, 3
      %p138 = pnand %p136, %p137
      %p139 = pneg %p138
      // Predicated region
      $region9: #{tpu_custom_call.1} parent=5 // pred_check
        _
      $region10: #{tpu_custom_call.1} parent=5 // pred_check_branch
        %141 = sbr.rel (%p138) target = $region12
      $region11: #{tpu_custom_call.1} parent=5 // pred_region
        %s142 = ssub.s32 %s13, 1
        // Predicated region
        $region13: #{tpu_custom_call.1} parent=11 // pred_check
          %p143 = pneg %p60
        $region14: #{tpu_custom_call.1} parent=11 // pred_check_branch
          %145 = sbr.rel (%p143) target = $region16
        $region15: #{tpu_custom_call.1} parent=11 // pred_region
          _
        $region16: #{tpu_custom_call.1} parent=11 // pred_fallthru
          _
        // Predicated region
        $region17: #{tpu_custom_call.1} parent=11 // pred_check
          %p146 = pneg %p81
        $region18: #{tpu_custom_call.1} parent=11 // pred_check_branch
          %148 = sbr.rel (%p146) target = $region20
        $region19: #{tpu_custom_call.1} parent=11 // pred_region
          _
        $region20: #{tpu_custom_call.1} parent=11 // pred_fallthru
          _
        // Predicated region
        $region21: #{tpu_custom_call.1} parent=11 // pred_check
          %p149 = pneg %p102
        $region22: #{tpu_custom_call.1} parent=11 // pred_check_branch
          %151 = sbr.rel (%p149) target = $region24
        $region23: #{tpu_custom_call.1} parent=11 // pred_region
          _
        $region24: #{tpu_custom_call.1} parent=11 // pred_fallthru
          _
      $region12: #{tpu_custom_call.1} parent=5 // pred_fallthru
        _
      %p152 = scmp.lt.s32.totalorder %s13, 2
      // Predicated region
      $region25: #{tpu_custom_call.1} parent=5 // pred_check
        %p153 = pneg %p152
      $region26: #{tpu_custom_call.1} parent=5 // pred_check_branch
        %155 = sbr.rel (%p153) target = $region28
      $region27: #{tpu_custom_call.1} parent=5 // pred_region
        // Predicated region
        $region29: #{tpu_custom_call.1} parent=27 // pred_check
          %p156 = pneg %p33
        $region30: #{tpu_custom_call.1} parent=27 // pred_check_branch
          %158 = sbr.rel (%p156) target = $region32
        $region31: #{tpu_custom_call.1} parent=27 // pred_region
          %p159 = scmp.lt.s32.totalorder %s13, 1
          %s160 = scalar_select %p159, %s13, 1
          %s161 = smul.addr %s160, 2
          %s162 = smul.addr %s161, 4
          %s163 = scalar_lea.vmem %s0, %s162
        $region32: #{tpu_custom_call.1} parent=27 // pred_fallthru
          _
      $region28: #{tpu_custom_call.1} parent=5 // pred_fallthru
        _
      %p164 = scmp.le.s32.totalorder 1, %s13
      %p165 = scmp.lt.s32.totalorder %s13, 3
      %p166 = pnand %p164, %p165
      %p167 = pneg %p166
      // Predicated region
      $region33: #{tpu_custom_call.1} parent=5 // pred_check
        _
      $region34: #{tpu_custom_call.1} parent=5 // pred_check_branch
        %169 = sbr.rel (%p166) target = $region36
      $region35: #{tpu_custom_call.1} parent=5 // pred_region
        %s170 = ssub.s32 %s13, 1
        %p171 = scmp.lt.s32.totalorder %s18, 1
        %s172 = scalar_select %p171, %s18, 1
        %s173 = smul.addr %s172, 2
        %s174 = smul.addr %s173, 4
        %s175 = scalar_lea.vmem %s0, %s174
        %p176 = pneg %p39
        %p177 = pneg %p36
        %p178 = pneg %p60
        %p179 = pneg %p57
        %p180 = pneg %p81
        %p181 = pneg %p78
        %p182 = pneg %p102
        %p183 = pneg %p99
        %p184 = pneg %p128
        %p185 = pneg %p125
        %s186 = sand.u32 %s115, 1
        %s187 = scalar_lea.sflag [#allocation3], %s186
        %s188 = sand.u32 %s115, 1
        %s189 = smul.addr %s188, 8
        %s190 = scalar_lea.vmem [#allocation2], %s189
        %p191 = scmp.lt.s32.totalorder %s18, 1
        %s192 = scalar_select %p191, %s18, 1
        %s193 = smul.addr %s192, 2
        %s194 = smul.addr %s193, 4
        %s195 = scalar_lea.vmem %s0, %s194
        %v196 = vld [vmem:[%s195] sm:$0xff]
        %v197 = vlaneseq
        %v198 = vand.u32 %v197, 127
        %v199 = vadd.s32 %v198, 128
        %vm200 = vcmp.lt.s32.totalorder %v198, 0
        %v201 = vsub.s32 0, %v198
        %v202 = vsel %vm200, %v201, %v198
        %v203 = vshrl.u32 %v202, 4
        %v204 = vand.u32 %v202, 15
        %v205 = vsub.s32 0, %v204
        %v206 = vsel %vm200, %v205, %v204
        %vm207 = vcmp.lt.s32.totalorder %v199, 0
        %v208 = vsub.s32 0, %v199
        %v209 = vsel %vm207, %v208, %v199
        %v210 = vshrl.u32 %v209, 4
        %v211 = vand.u32 %v209, 15
        %v212 = vsub.s32 0, %v211
        %v213 = vsel %vm207, %v212, %v211
        %vm214 = vcmp.ne.s32.totalorder %v206, 0
        %vm215 = vcmp.ne.s32.totalorder %v213, 0
        %vm216 = vcmp.lt.s32.totalorder %v206, 0
        %vm217 = vcmp.lt.s32.totalorder %v213, 0
        %vm218 = vmand %vm216, %vm214
        %vm219 = vmand %vm217, %vm215
        %v220 = vadd.s32 %v206, 16
        %v221 = vadd.s32 %v213, 16
        %v222 = vsel %vm218, %v220, %v206
        %v223 = vsel %vm219, %v221, %v213
        %vm224 = vcmp.ne.s32.totalorder %v222, 0
        %vm225 = vcmp.ne.s32.totalorder %v223, 0
        %vm226 = vcmp.ne.s32.totalorder %v222, 15
        %vm227 = vcmp.ne.s32.totalorder %v223, 15
        %v228 = vld [vmem:[%s3] sm:$0xf]
        %s229 = scalar_lea.vmem %s3, 4
        %v230 = vld [vmem:[%s229] sm:$0xf]
        %s231 = scalar_lea.vmem %s3, 8
        %v232 = vld [vmem:[%s231] sm:$0xf]
        %s233 = scalar_lea.vmem %s3, 12
        %v234 = vld [vmem:[%s233] sm:$0xf]
        %v236 = vcombine.high %v196, %v196
        %237 = vrot.lane.b32.xlu0 %v196, 17
        %v238 = vpop.permute.xlu0 %237
        %239 = vrot.lane.b32.xlu0 %v236, 17
        %v240 = vpop.permute.xlu0 %239
        %vm241 = vcmask 138240
        %v242 = vsel %vm241, %v238, %v240
        %v246 = vsel %vm241, 0.0, %v238
        %v247 = vsel %vm241, %v240, 0.0
        %v248 = vsel %vm224, 1, 0
        %v249 = vsel %vm225, 1, 0
        %vm250 = vcmp.eq.s32.totalorder %v248, 1
        %vm251 = vcmp.eq.s32.totalorder %v249, 1
        %v252 = vsel %vm250, %v246, 0.0
        %v253 = vsel %vm251, %v242, 0.0
        %v254 = vld [vmem:[%s1] sm:$0xf]
        %s255 = scalar_lea.vmem %s1, 4
        %v256 = vld [vmem:[%s255] sm:$0xf]
        %259 = vrot.lane.b32.xlu0 %v246, 127
        %v260 = vpop.permute.xlu0 %259
        %261 = vrot.lane.b32.xlu0 %v242, 127
        %v262 = vpop.permute.xlu0 %261
        %263 = vrot.lane.b32.xlu0 %v247, 127
        %v264 = vpop.permute.xlu0 %263
        %vm265 = vcmask 1039360
        %v266 = vsel %vm265, %v260, %v262
        %v267 = vsel %vm265, %v262, %v264
        %vm268 = vcmask 31744
        %v270 = vsel %vm268, %v256, 0
        %vm272 = vcmask 1043456
        %v273 = vsel %vm272, %v266, 0
        %v275 = vsel %vm272, %v267, 0
        %277 = vmatprep.subr.mxu0 %v275
        %278 = vmatpush1.msra.mxu0 %v273
        %279 = vmatprep.subr.mxu0 0.0
        %280 = vmatpush1.msra.mxu0 0.0
        %281 = vmatprep.subr.mxu0 0.0
        %282 = vmatpush1.msra.mxu0 0.0
        %283 = vmatprep.subr.mxu0 0.0
        %284 = vmatpush1.msra.mxu0 0.0
        %285 = vmatprep.subr.mxu0 0.0
        %286 = vmatpush1.msra.mxu0 0.0
        %287 = vmatprep.subr.mxu0 0.0
        %288 = vmatpush1.msra.mxu0 0.0
        %289 = vmatprep.subr.mxu0 0.0
        %290 = vmatpush1.msra.mxu0 0.0
        %291 = vmatprep.subr.mxu0 0.0
        %292 = vmatpush1.msra.mxu0 0.0
        %293 = vmatprep.subr.mxu0 0.0
        %294 = vmatpush1.msra.mxu0 0.0
        %295 = vmatprep.subr.mxu0 0.0
        %296 = vmatpush1.msra.mxu0 0.0
        %297 = vmatprep.subr.mxu0 0.0
        %298 = vmatpush1.msra.mxu0 0.0
        %299 = vmatprep.subr.mxu0 0.0
        %300 = vmatpush1.msra.mxu0 0.0
        %301 = vmatprep.subr.mxu0 0.0
        %302 = vmatpush1.msra.mxu0 0.0
        %303 = vmatprep.subr.mxu0 0.0
        %304 = vmatpush1.msra.mxu0 0.0
        %305 = vmatprep.subr.mxu0 0.0
        %306 = vmatpush1.msra.mxu0 0.0
        %307 = vmatprep.subr.mxu0 0.0
        %308 = vmatpush1.msra.mxu0 0.0
        %309 = vmatprep.subr.mxu0 0.0
        %310 = vmatpush1.msra.mxu0 0.0
        %311 = vmatprep.subr.mxu0 0.0
        %312 = vmatpush1.msra.mxu0 0.0
        %313 = vmatprep.subr.mxu0 0.0
        %314 = vmatpush1.msra.mxu0 0.0
        %315 = vmatprep.subr.mxu0 0.0
        %316 = vmatpush1.msra.mxu0 0.0
        %317 = vmatprep.subr.mxu0 0.0
        %318 = vmatpush1.msra.mxu0 0.0
        %319 = vmatprep.subr.mxu0 0.0
        %320 = vmatpush1.msra.mxu0 0.0
        %321 = vmatprep.subr.mxu0 0.0
        %322 = vmatpush1.msra.mxu0 0.0
        %323 = vmatprep.subr.mxu0 0.0
        %324 = vmatpush1.msra.mxu0 0.0
        %325 = vmatprep.subr.mxu0 0.0
        %326 = vmatpush1.msra.mxu0 0.0
        %327 = vmatprep.subr.mxu0 0.0
        %328 = vmatpush1.msra.mxu0 0.0
        %329 = vmatprep.subr.mxu0 0.0
        %330 = vmatpush1.msra.mxu0 0.0
        %331 = vmatprep.subr.mxu0 0.0
        %332 = vmatpush1.msra.mxu0 0.0
        %333 = vmatprep.subr.mxu0 0.0
        %334 = vmatpush1.msra.mxu0 0.0
        %335 = vmatprep.subr.mxu0 0.0
        %336 = vmatpush1.msra.mxu0 0.0
        %337 = vmatprep.subr.mxu0 0.0
        %338 = vmatpush1.msra.mxu0 0.0
        %339 = vmatprep.subr.mxu0 0.0
        %340 = vmatpush1.msra.mxu0 0.0
        %341 = vmatprep.mubr.f32.mxu0 0.0
        %342 = vmatmul.mubr.f32.gmra.mrb[0].mxu0 %v270
        %v343 = vpop.f32.mrb[0].mxu0
        %v344 = vadd.f32 0.0, %v343
        %v345 = vpop.f32.mrb[0].mxu0
        %v346 = vadd.f32 0.0, %v345
        %347 = vdwg.mxu0
        %v349 = vsel %vm268, %v254, 0
        %v352 = vsel %vm272, %v252, 0
        %v355 = vsel %vm272, %v253, 0
        %357 = vmatprep.subr.mxu0 %v355
        %358 = vmatpush1.msra.mxu0 %v352
        %359 = vmatprep.subr.mxu0 0.0
        %360 = vmatpush1.msra.mxu0 0.0
        %361 = vmatprep.subr.mxu0 0.0
        %362 = vmatpush1.msra.mxu0 0.0
        %363 = vmatprep.subr.mxu0 0.0
        %364 = vmatpush1.msra.mxu0 0.0
        %365 = vmatprep.subr.mxu0 0.0
        %366 = vmatpush1.msra.mxu0 0.0
        %367 = vmatprep.subr.mxu0 0.0
        %368 = vmatpush1.msra.mxu0 0.0
        %369 = vmatprep.subr.mxu0 0.0
        %370 = vmatpush1.msra.mxu0 0.0
        %371 = vmatprep.subr.mxu0 0.0
        %372 = vmatpush1.msra.mxu0 0.0
        %373 = vmatprep.subr.mxu0 0.0
        %374 = vmatpush1.msra.mxu0 0.0
        %375 = vmatprep.subr.mxu0 0.0
        %376 = vmatpush1.msra.mxu0 0.0
        %377 = vmatprep.subr.mxu0 0.0
        %378 = vmatpush1.msra.mxu0 0.0
        %379 = vmatprep.subr.mxu0 0.0
        %380 = vmatpush1.msra.mxu0 0.0
        %381 = vmatprep.subr.mxu0 0.0
        %382 = vmatpush1.msra.mxu0 0.0
        %383 = vmatprep.subr.mxu0 0.0
        %384 = vmatpush1.msra.mxu0 0.0
        %385 = vmatprep.subr.mxu0 0.0
        %386 = vmatpush1.msra.mxu0 0.0
        %387 = vmatprep.subr.mxu0 0.0
        %388 = vmatpush1.msra.mxu0 0.0
        %389 = vmatprep.subr.mxu0 0.0
        %390 = vmatpush1.msra.mxu0 0.0
        %391 = vmatprep.subr.mxu0 0.0
        %392 = vmatpush1.msra.mxu0 0.0
        %393 = vmatprep.subr.mxu0 0.0
        %394 = vmatpush1.msra.mxu0 0.0
        %395 = vmatprep.subr.mxu0 0.0
        %396 = vmatpush1.msra.mxu0 0.0
        %397 = vmatprep.subr.mxu0 0.0
        %398 = vmatpush1.msra.mxu0 0.0
        %399 = vmatprep.subr.mxu0 0.0
        %400 = vmatpush1.msra.mxu0 0.0
        %401 = vmatprep.subr.mxu0 0.0
        %402 = vmatpush1.msra.mxu0 0.0
        %403 = vmatprep.subr.mxu0 0.0
        %404 = vmatpush1.msra.mxu0 0.0
        %405 = vmatprep.subr.mxu0 0.0
        %406 = vmatpush1.msra.mxu0 0.0
        %407 = vmatprep.subr.mxu0 0.0
        %408 = vmatpush1.msra.mxu0 0.0
        %409 = vmatprep.subr.mxu0 0.0
        %410 = vmatpush1.msra.mxu0 0.0
        %411 = vmatprep.subr.mxu0 0.0
        %412 = vmatpush1.msra.mxu0 0.0
        %413 = vmatprep.subr.mxu0 0.0
        %414 = vmatpush1.msra.mxu0 0.0
        %415 = vmatprep.subr.mxu0 0.0
        %416 = vmatpush1.msra.mxu0 0.0
        %417 = vmatprep.subr.mxu0 0.0
        %418 = vmatpush1.msra.mxu0 0.0
        %419 = vmatprep.subr.mxu0 0.0
        %420 = vmatpush1.msra.mxu0 0.0
        %421 = vmatprep.mubr.f32.mxu0 0.0
        %422 = vmatmul.mubr.f32.gmra.mrb[0].mxu0 %v349
        %v423 = vpop.f32.mrb[0].mxu0
        %v424 = vadd.f32 %v344, %v423
        %v425 = vpop.f32.mrb[0].mxu0
        %v426 = vadd.f32 %v346, %v425
        %427 = vdwg.mxu0
        %v428 = vsel %vm226, 1, 0
        %v429 = vsel %vm227, 1, 0
        %vm430 = vcmp.eq.s32.totalorder %v428, 1
        %vm431 = vcmp.eq.s32.totalorder %v429, 1
        %432 = vrot.lane.b32.xlu0 %v246, 126
        %v433 = vpop.permute.xlu0 %432
        %434 = vrot.lane.b32.xlu0 %v242, 126
        %v435 = vpop.permute.xlu0 %434
        %436 = vrot.lane.b32.xlu0 %v247, 126
        %v437 = vpop.permute.xlu0 %436
        %vm438 = vcmask 1031168
        %v439 = vsel %vm438, %v433, %v435
        %v440 = vsel %vm438, %v435, %v437
        %v443 = vsel %vm430, %v439, 0.0
        %v444 = vsel %vm431, %v440, 0.0
        %s445 = scalar_lea.vmem %s1, 8
        %v446 = vld [vmem:[%s445] sm:$0xf]
        %v448 = vsel %vm268, %v446, 0
        %v451 = vsel %vm272, %v443, 0
        %v454 = vsel %vm272, %v444, 0
        %456 = vmatprep.subr.mxu0 %v454
        %457 = vmatpush1.msra.mxu0 %v451
        %458 = vmatprep.subr.mxu0 0.0
        %459 = vmatpush1.msra.mxu0 0.0
        %460 = vmatprep.subr.mxu0 0.0
        %461 = vmatpush1.msra.mxu0 0.0
        %462 = vmatprep.subr.mxu0 0.0
        %463 = vmatpush1.msra.mxu0 0.0
        %464 = vmatprep.subr.mxu0 0.0
        %465 = vmatpush1.msra.mxu0 0.0
        %466 = vmatprep.subr.mxu0 0.0
        %467 = vmatpush1.msra.mxu0 0.0
        %468 = vmatprep.subr.mxu0 0.0
        %469 = vmatpush1.msra.mxu0 0.0
        %470 = vmatprep.subr.mxu0 0.0
        %471 = vmatpush1.msra.mxu0 0.0
        %472 = vmatprep.subr.mxu0 0.0
        %473 = vmatpush1.msra.mxu0 0.0
        %474 = vmatprep.subr.mxu0 0.0
        %475 = vmatpush1.msra.mxu0 0.0
        %476 = vmatprep.subr.mxu0 0.0
        %477 = vmatpush1.msra.mxu0 0.0
        %478 = vmatprep.subr.mxu0 0.0
        %479 = vmatpush1.msra.mxu0 0.0
        %480 = vmatprep.subr.mxu0 0.0
        %481 = vmatpush1.msra.mxu0 0.0
        %482 = vmatprep.subr.mxu0 0.0
        %483 = vmatpush1.msra.mxu0 0.0
        %484 = vmatprep.subr.mxu0 0.0
        %485 = vmatpush1.msra.mxu0 0.0
        %486 = vmatprep.subr.mxu0 0.0
        %487 = vmatpush1.msra.mxu0 0.0
        %488 = vmatprep.subr.mxu0 0.0
        %489 = vmatpush1.msra.mxu0 0.0
        %490 = vmatprep.subr.mxu0 0.0
        %491 = vmatpush1.msra.mxu0 0.0
        %492 = vmatprep.subr.mxu0 0.0
        %493 = vmatpush1.msra.mxu0 0.0
        %494 = vmatprep.subr.mxu0 0.0
        %495 = vmatpush1.msra.mxu0 0.0
        %496 = vmatprep.subr.mxu0 0.0
        %497 = vmatpush1.msra.mxu0 0.0
        %498 = vmatprep.subr.mxu0 0.0
        %499 = vmatpush1.msra.mxu0 0.0
        %500 = vmatprep.subr.mxu0 0.0
        %501 = vmatpush1.msra.mxu0 0.0
        %502 = vmatprep.subr.mxu0 0.0
        %503 = vmatpush1.msra.mxu0 0.0
        %504 = vmatprep.subr.mxu0 0.0
        %505 = vmatpush1.msra.mxu0 0.0
        %506 = vmatprep.subr.mxu0 0.0
        %507 = vmatpush1.msra.mxu0 0.0
        %508 = vmatprep.subr.mxu0 0.0
        %509 = vmatpush1.msra.mxu0 0.0
        %510 = vmatprep.subr.mxu0 0.0
        %511 = vmatpush1.msra.mxu0 0.0
        %512 = vmatprep.subr.mxu0 0.0
        %513 = vmatpush1.msra.mxu0 0.0
        %514 = vmatprep.subr.mxu0 0.0
        %515 = vmatpush1.msra.mxu0 0.0
        %516 = vmatprep.subr.mxu0 0.0
        %517 = vmatpush1.msra.mxu0 0.0
        %518 = vmatprep.subr.mxu0 0.0
        %519 = vmatpush1.msra.mxu0 0.0
        %520 = vmatprep.mubr.f32.mxu0 0.0
        %521 = vmatmul.mubr.f32.gmra.mrb[0].mxu0 %v448
        %v522 = vpop.f32.mrb[0].mxu0
        %v523 = vadd.f32 0.0, %v522
        %v524 = vpop.f32.mrb[0].mxu0
        %v525 = vadd.f32 0.0, %v524
        %526 = vdwg.mxu0
        %v527 = vadd.f32 %v424, %v523
        %v528 = vadd.f32 %v426, %v525
        %529 = vrot.lane.b32.xlu0 %v246, 112
        %v530 = vpop.permute.xlu0 %529
        %531 = vrot.lane.b32.xlu0 %v242, 112
        %v532 = vpop.permute.xlu0 %531
        %533 = vrot.lane.b32.xlu0 %v247, 112
        %v534 = vpop.permute.xlu0 %533
        %vm535 = vcmask 916480
        %v536 = vsel %vm535, %v530, %v532
        %v537 = vsel %vm535, %v532, %v534
        %v540 = vsel %vm250, %v536, 0.0
        %v541 = vsel %vm251, %v537, 0.0
        %s542 = scalar_lea.vmem %s1, 12
        %v543 = vld [vmem:[%s542] sm:$0xf]
        %v545 = vsel %vm268, %v543, 0
        %v548 = vsel %vm272, %v540, 0
        %v551 = vsel %vm272, %v541, 0
        %553 = vmatprep.subr.mxu0 %v551
        %554 = vmatpush1.msra.mxu0 %v548
        %555 = vmatprep.subr.mxu0 0.0
        %556 = vmatpush1.msra.mxu0 0.0
        %557 = vmatprep.subr.mxu0 0.0
        %558 = vmatpush1.msra.mxu0 0.0
        %559 = vmatprep.subr.mxu0 0.0
        %560 = vmatpush1.msra.mxu0 0.0
        %561 = vmatprep.subr.mxu0 0.0
        %562 = vmatpush1.msra.mxu0 0.0
        %563 = vmatprep.subr.mxu0 0.0
        %564 = vmatpush1.msra.mxu0 0.0
        %565 = vmatprep.subr.mxu0 0.0
        %566 = vmatpush1.msra.mxu0 0.0
        %567 = vmatprep.subr.mxu0 0.0
        %568 = vmatpush1.msra.mxu0 0.0
        %569 = vmatprep.subr.mxu0 0.0
        %570 = vmatpush1.msra.mxu0 0.0
        %571 = vmatprep.subr.mxu0 0.0
        %572 = vmatpush1.msra.mxu0 0.0
        %573 = vmatprep.subr.mxu0 0.0
        %574 = vmatpush1.msra.mxu0 0.0
        %575 = vmatprep.subr.mxu0 0.0
        %576 = vmatpush1.msra.mxu0 0.0
        %577 = vmatprep.subr.mxu0 0.0
        %578 = vmatpush1.msra.mxu0 0.0
        %579 = vmatprep.subr.mxu0 0.0
        %580 = vmatpush1.msra.mxu0 0.0
        %581 = vmatprep.subr.mxu0 0.0
        %582 = vmatpush1.msra.mxu0 0.0
        %583 = vmatprep.subr.mxu0 0.0
        %584 = vmatpush1.msra.mxu0 0.0
        %585 = vmatprep.subr.mxu0 0.0
        %586 = vmatpush1.msra.mxu0 0.0
        %587 = vmatprep.subr.mxu0 0.0
        %588 = vmatpush1.msra.mxu0 0.0
        %589 = vmatprep.subr.mxu0 0.0
        %590 = vmatpush1.msra.mxu0 0.0
        %591 = vmatprep.subr.mxu0 0.0
        %592 = vmatpush1.msra.mxu0 0.0
        %593 = vmatprep.subr.mxu0 0.0
        %594 = vmatpush1.msra.mxu0 0.0
        %595 = vmatprep.subr.mxu0 0.0
        %596 = vmatpush1.msra.mxu0 0.0
        %597 = vmatprep.subr.mxu0 0.0
        %598 = vmatpush1.msra.mxu0 0.0
        %599 = vmatprep.subr.mxu0 0.0
        %600 = vmatpush1.msra.mxu0 0.0
        %601 = vmatprep.subr.mxu0 0.0
        %602 = vmatpush1.msra.mxu0 0.0
        %603 = vmatprep.subr.mxu0 0.0
        %604 = vmatpush1.msra.mxu0 0.0
        %605 = vmatprep.subr.mxu0 0.0
        %606 = vmatpush1.msra.mxu0 0.0
        %607 = vmatprep.subr.mxu0 0.0
        %608 = vmatpush1.msra.mxu0 0.0
        %609 = vmatprep.subr.mxu0 0.0
        %610 = vmatpush1.msra.mxu0 0.0
        %611 = vmatprep.subr.mxu0 0.0
        %612 = vmatpush1.msra.mxu0 0.0
        %613 = vmatprep.subr.mxu0 0.0
        %614 = vmatpush1.msra.mxu0 0.0
        %615 = vmatprep.subr.mxu0 0.0
        %616 = vmatpush1.msra.mxu0 0.0
        %617 = vmatprep.mubr.f32.mxu0 0.0
        %618 = vmatmul.mubr.f32.gmra.mrb[0].mxu0 %v545
        %v619 = vpop.f32.mrb[0].mxu0
        %v620 = vadd.f32 0.0, %v619
        %v621 = vpop.f32.mrb[0].mxu0
        %v622 = vadd.f32 0.0, %v621
        %623 = vdwg.mxu0
        %v624 = vadd.f32 %v527, %v620
        %v625 = vadd.f32 %v528, %v622
        %s626 = scalar_lea.vmem %s1, 16
        %v627 = vld [vmem:[%s626] sm:$0xf]
        %628 = vrot.lane.b32.xlu0 %v246, 111
        %v629 = vpop.permute.xlu0 %628
        %630 = vrot.lane.b32.xlu0 %v242, 111
        %v631 = vpop.permute.xlu0 %630
        %632 = vrot.lane.b32.xlu0 %v247, 111
        %v633 = vpop.permute.xlu0 %632
        %vm634 = vcmask 908288
        %v635 = vsel %vm634, %v629, %v631
        %v636 = vsel %vm634, %v631, %v633
        %v638 = vsel %vm268, %v627, 0
        %v640 = vsel %vm272, %v635, 0
        %v642 = vsel %vm272, %v636, 0
        %644 = vmatprep.subr.mxu0 %v642
        %645 = vmatpush1.msra.mxu0 %v640
        %646 = vmatprep.subr.mxu0 0.0
        %647 = vmatpush1.msra.mxu0 0.0
        %648 = vmatprep.subr.mxu0 0.0
        %649 = vmatpush1.msra.mxu0 0.0
        %650 = vmatprep.subr.mxu0 0.0
        %651 = vmatpush1.msra.mxu0 0.0
        %652 = vmatprep.subr.mxu0 0.0
        %653 = vmatpush1.msra.mxu0 0.0
        %654 = vmatprep.subr.mxu0 0.0
        %655 = vmatpush1.msra.mxu0 0.0
        %656 = vmatprep.subr.mxu0 0.0
        %657 = vmatpush1.msra.mxu0 0.0
        %658 = vmatprep.subr.mxu0 0.0
        %659 = vmatpush1.msra.mxu0 0.0
        %660 = vmatprep.subr.mxu0 0.0
        %661 = vmatpush1.msra.mxu0 0.0
        %662 = vmatprep.subr.mxu0 0.0
        %663 = vmatpush1.msra.mxu0 0.0
        %664 = vmatprep.subr.mxu0 0.0
        %665 = vmatpush1.msra.mxu0 0.0
        %666 = vmatprep.subr.mxu0 0.0
        %667 = vmatpush1.msra.mxu0 0.0
        %668 = vmatprep.subr.mxu0 0.0
        %669 = vmatpush1.msra.mxu0 0.0
        %670 = vmatprep.subr.mxu0 0.0
        %671 = vmatpush1.msra.mxu0 0.0
        %672 = vmatprep.subr.mxu0 0.0
        %673 = vmatpush1.msra.mxu0 0.0
        %674 = vmatprep.subr.mxu0 0.0
        %675 = vmatpush1.msra.mxu0 0.0
        %676 = vmatprep.subr.mxu0 0.0
        %677 = vmatpush1.msra.mxu0 0.0
        %678 = vmatprep.subr.mxu0 0.0
        %679 = vmatpush1.msra.mxu0 0.0
        %680 = vmatprep.subr.mxu0 0.0
        %681 = vmatpush1.msra.mxu0 0.0
        %682 = vmatprep.subr.mxu0 0.0
        %683 = vmatpush1.msra.mxu0 0.0
        %684 = vmatprep.subr.mxu0 0.0
        %685 = vmatpush1.msra.mxu0 0.0
        %686 = vmatprep.subr.mxu0 0.0
        %687 = vmatpush1.msra.mxu0 0.0
        %688 = vmatprep.subr.mxu0 0.0
        %689 = vmatpush1.msra.mxu0 0.0
        %690 = vmatprep.subr.mxu0 0.0
        %691 = vmatpush1.msra.mxu0 0.0
        %692 = vmatprep.subr.mxu0 0.0
        %693 = vmatpush1.msra.mxu0 0.0
        %694 = vmatprep.subr.mxu0 0.0
        %695 = vmatpush1.msra.mxu0 0.0
        %696 = vmatprep.subr.mxu0 0.0
        %697 = vmatpush1.msra.mxu0 0.0
        %698 = vmatprep.subr.mxu0 0.0
        %699 = vmatpush1.msra.mxu0 0.0
        %700 = vmatprep.subr.mxu0 0.0
        %701 = vmatpush1.msra.mxu0 0.0
        %702 = vmatprep.subr.mxu0 0.0
        %703 = vmatpush1.msra.mxu0 0.0
        %704 = vmatprep.subr.mxu0 0.0
        %705 = vmatpush1.msra.mxu0 0.0
        %706 = vmatprep.subr.mxu0 0.0
        %707 = vmatpush1.msra.mxu0 0.0
        %708 = vmatprep.mubr.f32.mxu0 0.0
        %709 = vmatmul.mubr.f32.gmra.mrb[0].mxu0 %v638
        %v710 = vpop.f32.mrb[0].mxu0
        %v711 = vadd.f32 0.0, %v710
        %v712 = vpop.f32.mrb[0].mxu0
        %v713 = vadd.f32 0.0, %v712
        %714 = vdwg.mxu0
        %v715 = vadd.f32 %v624, %v711
        %v716 = vadd.f32 %v625, %v713
        %717 = vrot.lane.b32.xlu0 %v246, 110
        %v718 = vpop.permute.xlu0 %717
        %719 = vrot.lane.b32.xlu0 %v242, 110
        %v720 = vpop.permute.xlu0 %719
        %721 = vrot.lane.b32.xlu0 %v247, 110
        %v722 = vpop.permute.xlu0 %721
        %vm723 = vcmask 900096
        %v724 = vsel %vm723, %v718, %v720
        %v725 = vsel %vm723, %v720, %v722
        %v728 = vsel %vm430, %v724, 0.0
        %v729 = vsel %vm431, %v725, 0.0
        %s730 = scalar_lea.vmem %s1, 20
        %v731 = vld [vmem:[%s730] sm:$0xf]
        %v733 = vsel %vm268, %v731, 0
        %v736 = vsel %vm272, %v728, 0
        %v739 = vsel %vm272, %v729, 0
        %741 = vmatprep.subr.mxu0 %v739
        %742 = vmatpush1.msra.mxu0 %v736
        %743 = vmatprep.subr.mxu0 0.0
        %744 = vmatpush1.msra.mxu0 0.0
        %745 = vmatprep.subr.mxu0 0.0
        %746 = vmatpush1.msra.mxu0 0.0
        %747 = vmatprep.subr.mxu0 0.0
        %748 = vmatpush1.msra.mxu0 0.0
        %749 = vmatprep.subr.mxu0 0.0
        %750 = vmatpush1.msra.mxu0 0.0
        %751 = vmatprep.subr.mxu0 0.0
        %752 = vmatpush1.msra.mxu0 0.0
        %753 = vmatprep.subr.mxu0 0.0
        %754 = vmatpush1.msra.mxu0 0.0
        %755 = vmatprep.subr.mxu0 0.0
        %756 = vmatpush1.msra.mxu0 0.0
        %757 = vmatprep.subr.mxu0 0.0
        %758 = vmatpush1.msra.mxu0 0.0
        %759 = vmatprep.subr.mxu0 0.0
        %760 = vmatpush1.msra.mxu0 0.0
        %761 = vmatprep.subr.mxu0 0.0
        %762 = vmatpush1.msra.mxu0 0.0
        %763 = vmatprep.subr.mxu0 0.0
        %764 = vmatpush1.msra.mxu0 0.0
        %765 = vmatprep.subr.mxu0 0.0
        %766 = vmatpush1.msra.mxu0 0.0
        %767 = vmatprep.subr.mxu0 0.0
        %768 = vmatpush1.msra.mxu0 0.0
        %769 = vmatprep.subr.mxu0 0.0
        %770 = vmatpush1.msra.mxu0 0.0
        %771 = vmatprep.subr.mxu0 0.0
        %772 = vmatpush1.msra.mxu0 0.0
        %773 = vmatprep.subr.mxu0 0.0
        %774 = vmatpush1.msra.mxu0 0.0
        %775 = vmatprep.subr.mxu0 0.0
        %776 = vmatpush1.msra.mxu0 0.0
        %777 = vmatprep.subr.mxu0 0.0
        %778 = vmatpush1.msra.mxu0 0.0
        %779 = vmatprep.subr.mxu0 0.0
        %780 = vmatpush1.msra.mxu0 0.0
        %781 = vmatprep.subr.mxu0 0.0
        %782 = vmatpush1.msra.mxu0 0.0
        %783 = vmatprep.subr.mxu0 0.0
        %784 = vmatpush1.msra.mxu0 0.0
        %785 = vmatprep.subr.mxu0 0.0
        %786 = vmatpush1.msra.mxu0 0.0
        %787 = vmatprep.subr.mxu0 0.0
        %788 = vmatpush1.msra.mxu0 0.0
        %789 = vmatprep.subr.mxu0 0.0
        %790 = vmatpush1.msra.mxu0 0.0
        %791 = vmatprep.subr.mxu0 0.0
        %792 = vmatpush1.msra.mxu0 0.0
        %793 = vmatprep.subr.mxu0 0.0
        %794 = vmatpush1.msra.mxu0 0.0
        %795 = vmatprep.subr.mxu0 0.0
        %796 = vmatpush1.msra.mxu0 0.0
        %797 = vmatprep.subr.mxu0 0.0
        %798 = vmatpush1.msra.mxu0 0.0
        %799 = vmatprep.subr.mxu0 0.0
        %800 = vmatpush1.msra.mxu0 0.0
        %801 = vmatprep.subr.mxu0 0.0
        %802 = vmatpush1.msra.mxu0 0.0
        %803 = vmatprep.subr.mxu0 0.0
        %804 = vmatpush1.msra.mxu0 0.0
        %805 = vmatprep.mubr.f32.mxu0 0.0
        %806 = vmatmul.mubr.f32.gmra.mrb[0].mxu0 %v733
        %v807 = vpop.f32.mrb[0].mxu0
        %v808 = vadd.f32 0.0, %v807
        %v809 = vpop.f32.mrb[0].mxu0
        %v810 = vadd.f32 0.0, %v809
        %811 = vdwg.mxu0
        %v812 = vadd.f32 %v715, %v808
        %v813 = vadd.f32 %v716, %v810
        %814 = vrot.lane.b32.xlu0 %v246, 96
        %v815 = vpop.permute.xlu0 %814
        %816 = vrot.lane.b32.xlu0 %v242, 96
        %v817 = vpop.permute.xlu0 %816
        %818 = vrot.lane.b32.xlu0 %v247, 96
        %v819 = vpop.permute.xlu0 %818
        %vm820 = vcmask 785408
        %v821 = vsel %vm820, %v815, %v817
        %v822 = vsel %vm820, %v817, %v819
        %v825 = vsel %vm250, %v821, 0.0
        %v826 = vsel %vm251, %v822, 0.0
        %s827 = scalar_lea.vmem %s1, 24
        %v828 = vld [vmem:[%s827] sm:$0xf]
        %v830 = vsel %vm268, %v828, 0
        %v833 = vsel %vm272, %v825, 0
        %v836 = vsel %vm272, %v826, 0
        %838 = vmatprep.subr.mxu0 %v836
        %839 = vmatpush1.msra.mxu0 %v833
        %840 = vmatprep.subr.mxu0 0.0
        %841 = vmatpush1.msra.mxu0 0.0
        %842 = vmatprep.subr.mxu0 0.0
        %843 = vmatpush1.msra.mxu0 0.0
        %844 = vmatprep.subr.mxu0 0.0
        %845 = vmatpush1.msra.mxu0 0.0
        %846 = vmatprep.subr.mxu0 0.0
        %847 = vmatpush1.msra.mxu0 0.0
        %848 = vmatprep.subr.mxu0 0.0
        %849 = vmatpush1.msra.mxu0 0.0
        %850 = vmatprep.subr.mxu0 0.0
        %851 = vmatpush1.msra.mxu0 0.0
        %852 = vmatprep.subr.mxu0 0.0
        %853 = vmatpush1.msra.mxu0 0.0
        %854 = vmatprep.subr.mxu0 0.0
        %855 = vmatpush1.msra.mxu0 0.0
        %856 = vmatprep.subr.mxu0 0.0
        %857 = vmatpush1.msra.mxu0 0.0
        %858 = vmatprep.subr.mxu0 0.0
        %859 = vmatpush1.msra.mxu0 0.0
        %860 = vmatprep.subr.mxu0 0.0
        %861 = vmatpush1.msra.mxu0 0.0
        %862 = vmatprep.subr.mxu0 0.0
        %863 = vmatpush1.msra.mxu0 0.0
        %864 = vmatprep.subr.mxu0 0.0
        %865 = vmatpush1.msra.mxu0 0.0
        %866 = vmatprep.subr.mxu0 0.0
        %867 = vmatpush1.msra.mxu0 0.0
        %868 = vmatprep.subr.mxu0 0.0
        %869 = vmatpush1.msra.mxu0 0.0
        %870 = vmatprep.subr.mxu0 0.0
        %871 = vmatpush1.msra.mxu0 0.0
        %872 = vmatprep.subr.mxu0 0.0
        %873 = vmatpush1.msra.mxu0 0.0
        %874 = vmatprep.subr.mxu0 0.0
        %875 = vmatpush1.msra.mxu0 0.0
        %876 = vmatprep.subr.mxu0 0.0
        %877 = vmatpush1.msra.mxu0 0.0
        %878 = vmatprep.subr.mxu0 0.0
        %879 = vmatpush1.msra.mxu0 0.0
        %880 = vmatprep.subr.mxu0 0.0
        %881 = vmatpush1.msra.mxu0 0.0
        %882 = vmatprep.subr.mxu0 0.0
        %883 = vmatpush1.msra.mxu0 0.0
        %884 = vmatprep.subr.mxu0 0.0
        %885 = vmatpush1.msra.mxu0 0.0
        %886 = vmatprep.subr.mxu0 0.0
        %887 = vmatpush1.msra.mxu0 0.0
        %888 = vmatprep.subr.mxu0 0.0
        %889 = vmatpush1.msra.mxu0 0.0
        %890 = vmatprep.subr.mxu0 0.0
        %891 = vmatpush1.msra.mxu0 0.0
        %892 = vmatprep.subr.mxu0 0.0
        %893 = vmatpush1.msra.mxu0 0.0
        %894 = vmatprep.subr.mxu0 0.0
        %895 = vmatpush1.msra.mxu0 0.0
        %896 = vmatprep.subr.mxu0 0.0
        %897 = vmatpush1.msra.mxu0 0.0
        %898 = vmatprep.subr.mxu0 0.0
        %899 = vmatpush1.msra.mxu0 0.0
        %900 = vmatprep.subr.mxu0 0.0
        %901 = vmatpush1.msra.mxu0 0.0
        %902 = vmatprep.mubr.f32.mxu0 0.0
        %903 = vmatmul.mubr.f32.gmra.mrb[0].mxu0 %v830
        %v904 = vpop.f32.mrb[0].mxu0
        %v905 = vadd.f32 0.0, %v904
        %v906 = vpop.f32.mrb[0].mxu0
        %v907 = vadd.f32 0.0, %v906
        %908 = vdwg.mxu0
        %v909 = vadd.f32 %v812, %v905
        %v910 = vadd.f32 %v813, %v907
        %s911 = scalar_lea.vmem %s1, 28
        %v912 = vld [vmem:[%s911] sm:$0xf]
        %913 = vrot.lane.b32.xlu0 %v246, 95
        %v914 = vpop.permute.xlu0 %913
        %915 = vrot.lane.b32.xlu0 %v242, 95
        %v916 = vpop.permute.xlu0 %915
        %917 = vrot.lane.b32.xlu0 %v247, 95
        %v918 = vpop.permute.xlu0 %917
        %vm919 = vcmask 777216
        %v920 = vsel %vm919, %v914, %v916
        %v921 = vsel %vm919, %v916, %v918
        %v923 = vsel %vm268, %v912, 0
        %v925 = vsel %vm272, %v920, 0
        %v927 = vsel %vm272, %v921, 0
        %929 = vmatprep.subr.mxu0 %v927
        %930 = vmatpush1.msra.mxu0 %v925
        %931 = vmatprep.subr.mxu0 0.0
        %932 = vmatpush1.msra.mxu0 0.0
        %933 = vmatprep.subr.mxu0 0.0
        %934 = vmatpush1.msra.mxu0 0.0
        %935 = vmatprep.subr.mxu0 0.0
        %936 = vmatpush1.msra.mxu0 0.0
        %937 = vmatprep.subr.mxu0 0.0
        %938 = vmatpush1.msra.mxu0 0.0
        %939 = vmatprep.subr.mxu0 0.0
        %940 = vmatpush1.msra.mxu0 0.0
        %941 = vmatprep.subr.mxu0 0.0
        %942 = vmatpush1.msra.mxu0 0.0
        %943 = vmatprep.subr.mxu0 0.0
        %944 = vmatpush1.msra.mxu0 0.0
        %945 = vmatprep.subr.mxu0 0.0
        %946 = vmatpush1.msra.mxu0 0.0
        %947 = vmatprep.subr.mxu0 0.0
        %948 = vmatpush1.msra.mxu0 0.0
        %949 = vmatprep.subr.mxu0 0.0
        %950 = vmatpush1.msra.mxu0 0.0
        %951 = vmatprep.subr.mxu0 0.0
        %952 = vmatpush1.msra.mxu0 0.0
        %953 = vmatprep.subr.mxu0 0.0
        %954 = vmatpush1.msra.mxu0 0.0
        %955 = vmatprep.subr.mxu0 0.0
        %956 = vmatpush1.msra.mxu0 0.0
        %957 = vmatprep.subr.mxu0 0.0
        %958 = vmatpush1.msra.mxu0 0.0
        %959 = vmatprep.subr.mxu0 0.0
        %960 = vmatpush1.msra.mxu0 0.0
        %961 = vmatprep.subr.mxu0 0.0
        %962 = vmatpush1.msra.mxu0 0.0
        %963 = vmatprep.subr.mxu0 0.0
        %964 = vmatpush1.msra.mxu0 0.0
        %965 = vmatprep.subr.mxu0 0.0
        %966 = vmatpush1.msra.mxu0 0.0
        %967 = vmatprep.subr.mxu0 0.0
        %968 = vmatpush1.msra.mxu0 0.0
        %969 = vmatprep.subr.mxu0 0.0
        %970 = vmatpush1.msra.mxu0 0.0
        %971 = vmatprep.subr.mxu0 0.0
        %972 = vmatpush1.msra.mxu0 0.0
        %973 = vmatprep.subr.mxu0 0.0
        %974 = vmatpush1.msra.mxu0 0.0
        %975 = vmatprep.subr.mxu0 0.0
        %976 = vmatpush1.msra.mxu0 0.0
        %977 = vmatprep.subr.mxu0 0.0
        %978 = vmatpush1.msra.mxu0 0.0
        %979 = vmatprep.subr.mxu0 0.0
        %980 = vmatpush1.msra.mxu0 0.0
        %981 = vmatprep.subr.mxu0 0.0
        %982 = vmatpush1.msra.mxu0 0.0
        %983 = vmatprep.subr.mxu0 0.0
        %984 = vmatpush1.msra.mxu0 0.0
        %985 = vmatprep.subr.mxu0 0.0
        %986 = vmatpush1.msra.mxu0 0.0
        %987 = vmatprep.subr.mxu0 0.0
        %988 = vmatpush1.msra.mxu0 0.0
        %989 = vmatprep.subr.mxu0 0.0
        %990 = vmatpush1.msra.mxu0 0.0
        %991 = vmatprep.subr.mxu0 0.0
        %992 = vmatpush1.msra.mxu0 0.0
        %993 = vmatprep.mubr.f32.mxu0 0.0
        %994 = vmatmul.mubr.f32.gmra.mrb[0].mxu0 %v923
        %v995 = vpop.f32.mrb[0].mxu0
        %v996 = vadd.f32 0.0, %v995
        %v997 = vpop.f32.mrb[0].mxu0
        %v998 = vadd.f32 0.0, %v997
        %999 = vdwg.mxu0
        %v1000 = vadd.f32 %v909, %v996
        %v1001 = vadd.f32 %v910, %v998
        %1002 = vrot.lane.b32.xlu0 %v246, 94
        %v1003 = vpop.permute.xlu0 %1002
        %1004 = vrot.lane.b32.xlu0 %v242, 94
        %v1005 = vpop.permute.xlu0 %1004
        %1006 = vrot.lane.b32.xlu0 %v247, 94
        %v1007 = vpop.permute.xlu0 %1006
        %vm1008 = vcmask 769024
        %v1009 = vsel %vm1008, %v1003, %v1005
        %v1010 = vsel %vm1008, %v1005, %v1007
        %v1013 = vsel %vm430, %v1009, 0.0
        %v1014 = vsel %vm431, %v1010, 0.0
        %s1015 = scalar_lea.vmem %s1, 32
        %v1016 = vld [vmem:[%s1015] sm:$0xf]
        %v1018 = vsel %vm268, %v1016, 0
        %v1021 = vsel %vm272, %v1013, 0
        %v1024 = vsel %vm272, %v1014, 0
        %1026 = vmatprep.subr.mxu0 %v1024
        %1027 = vmatpush1.msra.mxu0 %v1021
        %1028 = vmatprep.subr.mxu0 0.0
        %1029 = vmatpush1.msra.mxu0 0.0
        %1030 = vmatprep.subr.mxu0 0.0
        %1031 = vmatpush1.msra.mxu0 0.0
        %1032 = vmatprep.subr.mxu0 0.0
        %1033 = vmatpush1.msra.mxu0 0.0
        %1034 = vmatprep.subr.mxu0 0.0
        %1035 = vmatpush1.msra.mxu0 0.0
        %1036 = vmatprep.subr.mxu0 0.0
        %1037 = vmatpush1.msra.mxu0 0.0
        %1038 = vmatprep.subr.mxu0 0.0
        %1039 = vmatpush1.msra.mxu0 0.0
        %1040 = vmatprep.subr.mxu0 0.0
        %1041 = vmatpush1.msra.mxu0 0.0
        %1042 = vmatprep.subr.mxu0 0.0
        %1043 = vmatpush1.msra.mxu0 0.0
        %1044 = vmatprep.subr.mxu0 0.0
        %1045 = vmatpush1.msra.mxu0 0.0
        %1046 = vmatprep.subr.mxu0 0.0
        %1047 = vmatpush1.msra.mxu0 0.0
        %1048 = vmatprep.subr.mxu0 0.0
        %1049 = vmatpush1.msra.mxu0 0.0
        %1050 = vmatprep.subr.mxu0 0.0
        %1051 = vmatpush1.msra.mxu0 0.0
        %1052 = vmatprep.subr.mxu0 0.0
        %1053 = vmatpush1.msra.mxu0 0.0
        %1054 = vmatprep.subr.mxu0 0.0
        %1055 = vmatpush1.msra.mxu0 0.0
        %1056 = vmatprep.subr.mxu0 0.0
        %1057 = vmatpush1.msra.mxu0 0.0
        %1058 = vmatprep.subr.mxu0 0.0
        %1059 = vmatpush1.msra.mxu0 0.0
        %1060 = vmatprep.subr.mxu0 0.0
        %1061 = vmatpush1.msra.mxu0 0.0
        %1062 = vmatprep.subr.mxu0 0.0
        %1063 = vmatpush1.msra.mxu0 0.0
        %1064 = vmatprep.subr.mxu0 0.0
        %1065 = vmatpush1.msra.mxu0 0.0
        %1066 = vmatprep.subr.mxu0 0.0
        %1067 = vmatpush1.msra.mxu0 0.0
        %1068 = vmatprep.subr.mxu0 0.0
        %1069 = vmatpush1.msra.mxu0 0.0
        %1070 = vmatprep.subr.mxu0 0.0
        %1071 = vmatpush1.msra.mxu0 0.0
        %1072 = vmatprep.subr.mxu0 0.0
        %1073 = vmatpush1.msra.mxu0 0.0
        %1074 = vmatprep.subr.mxu0 0.0
        %1075 = vmatpush1.msra.mxu0 0.0
        %1076 = vmatprep.subr.mxu0 0.0
        %1077 = vmatpush1.msra.mxu0 0.0
        %1078 = vmatprep.subr.mxu0 0.0
        %1079 = vmatpush1.msra.mxu0 0.0
        %1080 = vmatprep.subr.mxu0 0.0
        %1081 = vmatpush1.msra.mxu0 0.0
        %1082 = vmatprep.subr.mxu0 0.0
        %1083 = vmatpush1.msra.mxu0 0.0
        %1084 = vmatprep.subr.mxu0 0.0
        %1085 = vmatpush1.msra.mxu0 0.0
        %1086 = vmatprep.subr.mxu0 0.0
        %1087 = vmatpush1.msra.mxu0 0.0
        %1088 = vmatprep.subr.mxu0 0.0
        %1089 = vmatpush1.msra.mxu0 0.0
        %1090 = vmatprep.mubr.f32.mxu0 0.0
        %1091 = vmatmul.mubr.f32.gmra.mrb[0].mxu0 %v1018
        %v1092 = vpop.f32.mrb[0].mxu0
        %v1093 = vadd.f32 0.0, %v1092
        %v1094 = vpop.f32.mrb[0].mxu0
        %v1095 = vadd.f32 0.0, %v1094
        %1096 = vdwg.mxu0
        %v1097 = vadd.f32 %v1000, %v1093
        %v1098 = vadd.f32 %v1001, %v1095
        %1100 = vset.pattern.permute.xlu0 0
        %1101 = vperm.xlu0 %1100, %v228
        %v1102 = vpop.permute.xlu0 %1101
        %v1104 = vmul.f32 %v1097, %v1102
        %v1105 = vmul.f32 %v1098, %v1102
        %1107 = vset.pattern.permute.xlu0 0
        %1108 = vperm.xlu0 %1107, %v230
        %v1109 = vpop.permute.xlu0 %1108
        %v1111 = vadd.f32 %v1104, %v1109
        %v1112 = vadd.f32 %v1105, %v1109
        %v1113 = vmax.f32 %v1111, 0.0
        %v1114 = vmax.f32 %v1112, 0.0
        %1117 = vrot.lane.b32.xlu0 %v1113, 17
        %v1118 = vpop.permute.xlu0 %1117
        %1119 = vrot.lane.b32.xlu0 %v1114, 17
        %v1120 = vpop.permute.xlu0 %1119
        %v1121 = vsel %vm241, %v1118, %v1120
        %v1125 = vsel %vm241, 0.0, %v1118
        %v1126 = vsel %vm241, %v1120, 0.0
        %v1127 = vsel %vm250, %v1125, 0.0
        %v1128 = vsel %vm251, %v1121, 0.0
        %v1129 = vld [vmem:[%s2] sm:$0xf]
        %s1130 = scalar_lea.vmem %s2, 4
        %v1131 = vld [vmem:[%s1130] sm:$0xf]
        %1134 = vrot.lane.b32.xlu0 %v1125, 127
        %v1135 = vpop.permute.xlu0 %1134
        %1136 = vrot.lane.b32.xlu0 %v1121, 127
        %v1137 = vpop.permute.xlu0 %1136
        %1138 = vrot.lane.b32.xlu0 %v1126, 127
        %v1139 = vpop.permute.xlu0 %1138
        %v1140 = vsel %vm265, %v1135, %v1137
        %v1141 = vsel %vm265, %v1137, %v1139
        %v1143 = vsel %vm268, %v1131, 0
        %v1145 = vsel %vm272, %v1140, 0
        %v1147 = vsel %vm272, %v1141, 0
        %1149 = vmatprep.subr.mxu0 %v1147
        %1150 = vmatpush1.msra.mxu0 %v1145
        %1151 = vmatprep.subr.mxu0 0.0
        %1152 = vmatpush1.msra.mxu0 0.0
        %1153 = vmatprep.subr.mxu0 0.0
        %1154 = vmatpush1.msra.mxu0 0.0
        %1155 = vmatprep.subr.mxu0 0.0
        %1156 = vmatpush1.msra.mxu0 0.0
        %1157 = vmatprep.subr.mxu0 0.0
        %1158 = vmatpush1.msra.mxu0 0.0
        %1159 = vmatprep.subr.mxu0 0.0
        %1160 = vmatpush1.msra.mxu0 0.0
        %1161 = vmatprep.subr.mxu0 0.0
        %1162 = vmatpush1.msra.mxu0 0.0
        %1163 = vmatprep.subr.mxu0 0.0
        %1164 = vmatpush1.msra.mxu0 0.0
        %1165 = vmatprep.subr.mxu0 0.0
        %1166 = vmatpush1.msra.mxu0 0.0
        %1167 = vmatprep.subr.mxu0 0.0
        %1168 = vmatpush1.msra.mxu0 0.0
        %1169 = vmatprep.subr.mxu0 0.0
        %1170 = vmatpush1.msra.mxu0 0.0
        %1171 = vmatprep.subr.mxu0 0.0
        %1172 = vmatpush1.msra.mxu0 0.0
        %1173 = vmatprep.subr.mxu0 0.0
        %1174 = vmatpush1.msra.mxu0 0.0
        %1175 = vmatprep.subr.mxu0 0.0
        %1176 = vmatpush1.msra.mxu0 0.0
        %1177 = vmatprep.subr.mxu0 0.0
        %1178 = vmatpush1.msra.mxu0 0.0
        %1179 = vmatprep.subr.mxu0 0.0
        %1180 = vmatpush1.msra.mxu0 0.0
        %1181 = vmatprep.subr.mxu0 0.0
        %1182 = vmatpush1.msra.mxu0 0.0
        %1183 = vmatprep.subr.mxu0 0.0
        %1184 = vmatpush1.msra.mxu0 0.0
        %1185 = vmatprep.subr.mxu0 0.0
        %1186 = vmatpush1.msra.mxu0 0.0
        %1187 = vmatprep.subr.mxu0 0.0
        %1188 = vmatpush1.msra.mxu0 0.0
        %1189 = vmatprep.subr.mxu0 0.0
        %1190 = vmatpush1.msra.mxu0 0.0
        %1191 = vmatprep.subr.mxu0 0.0
        %1192 = vmatpush1.msra.mxu0 0.0
        %1193 = vmatprep.subr.mxu0 0.0
        %1194 = vmatpush1.msra.mxu0 0.0
        %1195 = vmatprep.subr.mxu0 0.0
        %1196 = vmatpush1.msra.mxu0 0.0
        %1197 = vmatprep.subr.mxu0 0.0
        %1198 = vmatpush1.msra.mxu0 0.0
        %1199 = vmatprep.subr.mxu0 0.0
        %1200 = vmatpush1.msra.mxu0 0.0
        %1201 = vmatprep.subr.mxu0 0.0
        %1202 = vmatpush1.msra.mxu0 0.0
        %1203 = vmatprep.subr.mxu0 0.0
        %1204 = vmatpush1.msra.mxu0 0.0
        %1205 = vmatprep.subr.mxu0 0.0
        %1206 = vmatpush1.msra.mxu0 0.0
        %1207 = vmatprep.subr.mxu0 0.0
        %1208 = vmatpush1.msra.mxu0 0.0
        %1209 = vmatprep.subr.mxu0 0.0
        %1210 = vmatpush1.msra.mxu0 0.0
        %1211 = vmatprep.subr.mxu0 0.0
        %1212 = vmatpush1.msra.mxu0 0.0
        %1213 = vmatprep.mubr.f32.mxu0 0.0
        %1214 = vmatmul.mubr.f32.gmra.mrb[0].mxu0 %v1143
        %v1215 = vpop.f32.mrb[0].mxu0
        %v1216 = vadd.f32 0.0, %v1215
        %v1217 = vpop.f32.mrb[0].mxu0
        %v1218 = vadd.f32 0.0, %v1217
        %1219 = vdwg.mxu0
        %v1221 = vsel %vm268, %v1129, 0
        %v1224 = vsel %vm272, %v1127, 0
        %v1227 = vsel %vm272, %v1128, 0
        %1229 = vmatprep.subr.mxu0 %v1227
        %1230 = vmatpush1.msra.mxu0 %v1224
        %1231 = vmatprep.subr.mxu0 0.0
        %1232 = vmatpush1.msra.mxu0 0.0
        %1233 = vmatprep.subr.mxu0 0.0
        %1234 = vmatpush1.msra.mxu0 0.0
        %1235 = vmatprep.subr.mxu0 0.0
        %1236 = vmatpush1.msra.mxu0 0.0
        %1237 = vmatprep.subr.mxu0 0.0
        %1238 = vmatpush1.msra.mxu0 0.0
        %1239 = vmatprep.subr.mxu0 0.0
        %1240 = vmatpush1.msra.mxu0 0.0
        %1241 = vmatprep.subr.mxu0 0.0
        %1242 = vmatpush1.msra.mxu0 0.0
        %1243 = vmatprep.subr.mxu0 0.0
        %1244 = vmatpush1.msra.mxu0 0.0
        %1245 = vmatprep.subr.mxu0 0.0
        %1246 = vmatpush1.msra.mxu0 0.0
        %1247 = vmatprep.subr.mxu0 0.0
        %1248 = vmatpush1.msra.mxu0 0.0
        %1249 = vmatprep.subr.mxu0 0.0
        %1250 = vmatpush1.msra.mxu0 0.0
        %1251 = vmatprep.subr.mxu0 0.0
        %1252 = vmatpush1.msra.mxu0 0.0
        %1253 = vmatprep.subr.mxu0 0.0
        %1254 = vmatpush1.msra.mxu0 0.0
        %1255 = vmatprep.subr.mxu0 0.0
        %1256 = vmatpush1.msra.mxu0 0.0
        %1257 = vmatprep.subr.mxu0 0.0
        %1258 = vmatpush1.msra.mxu0 0.0
        %1259 = vmatprep.subr.mxu0 0.0
        %1260 = vmatpush1.msra.mxu0 0.0
        %1261 = vmatprep.subr.mxu0 0.0
        %1262 = vmatpush1.msra.mxu0 0.0
        %1263 = vmatprep.subr.mxu0 0.0
        %1264 = vmatpush1.msra.mxu0 0.0
        %1265 = vmatprep.subr.mxu0 0.0
        %1266 = vmatpush1.msra.mxu0 0.0
        %1267 = vmatprep.subr.mxu0 0.0
        %1268 = vmatpush1.msra.mxu0 0.0
        %1269 = vmatprep.subr.mxu0 0.0
        %1270 = vmatpush1.msra.mxu0 0.0
        %1271 = vmatprep.subr.mxu0 0.0
        %1272 = vmatpush1.msra.mxu0 0.0
        %1273 = vmatprep.subr.mxu0 0.0
        %1274 = vmatpush1.msra.mxu0 0.0
        %1275 = vmatprep.subr.mxu0 0.0
        %1276 = vmatpush1.msra.mxu0 0.0
        %1277 = vmatprep.subr.mxu0 0.0
        %1278 = vmatpush1.msra.mxu0 0.0
        %1279 = vmatprep.subr.mxu0 0.0
        %1280 = vmatpush1.msra.mxu0 0.0
        %1281 = vmatprep.subr.mxu0 0.0
        %1282 = vmatpush1.msra.mxu0 0.0
        %1283 = vmatprep.subr.mxu0 0.0
        %1284 = vmatpush1.msra.mxu0 0.0
        %1285 = vmatprep.subr.mxu0 0.0
        %1286 = vmatpush1.msra.mxu0 0.0
        %1287 = vmatprep.subr.mxu0 0.0
        %1288 = vmatpush1.msra.mxu0 0.0
        %1289 = vmatprep.subr.mxu0 0.0
        %1290 = vmatpush1.msra.mxu0 0.0
        %1291 = vmatprep.subr.mxu0 0.0
        %1292 = vmatpush1.msra.mxu0 0.0
        %1293 = vmatprep.mubr.f32.mxu0 0.0
        %1294 = vmatmul.mubr.f32.gmra.mrb[0].mxu0 %v1221
        %v1295 = vpop.f32.mrb[0].mxu0
        %v1296 = vadd.f32 %v1216, %v1295
        %v1297 = vpop.f32.mrb[0].mxu0
        %v1298 = vadd.f32 %v1218, %v1297
        %1299 = vdwg.mxu0
        %1300 = vrot.lane.b32.xlu0 %v1125, 126
        %v1301 = vpop.permute.xlu0 %1300
        %1302 = vrot.lane.b32.xlu0 %v1121, 126
        %v1303 = vpop.permute.xlu0 %1302
        %1304 = vrot.lane.b32.xlu0 %v1126, 126
        %v1305 = vpop.permute.xlu0 %1304
        %v1306 = vsel %vm438, %v1301, %v1303
        %v1307 = vsel %vm438, %v1303, %v1305
        %v1310 = vsel %vm430, %v1306, 0.0
        %v1311 = vsel %vm431, %v1307, 0.0
        %s1312 = scalar_lea.vmem %s2, 8
        %v1313 = vld [vmem:[%s1312] sm:$0xf]
        %v1315 = vsel %vm268, %v1313, 0
        %v1318 = vsel %vm272, %v1310, 0
        %v1321 = vsel %vm272, %v1311, 0
        %1323 = vmatprep.subr.mxu0 %v1321
        %1324 = vmatpush1.msra.mxu0 %v1318
        %1325 = vmatprep.subr.mxu0 0.0
        %1326 = vmatpush1.msra.mxu0 0.0
        %1327 = vmatprep.subr.mxu0 0.0
        %1328 = vmatpush1.msra.mxu0 0.0
        %1329 = vmatprep.subr.mxu0 0.0
        %1330 = vmatpush1.msra.mxu0 0.0
        %1331 = vmatprep.subr.mxu0 0.0
        %1332 = vmatpush1.msra.mxu0 0.0
        %1333 = vmatprep.subr.mxu0 0.0
        %1334 = vmatpush1.msra.mxu0 0.0
        %1335 = vmatprep.subr.mxu0 0.0
        %1336 = vmatpush1.msra.mxu0 0.0
        %1337 = vmatprep.subr.mxu0 0.0
        %1338 = vmatpush1.msra.mxu0 0.0
        %1339 = vmatprep.subr.mxu0 0.0
        %1340 = vmatpush1.msra.mxu0 0.0
        %1341 = vmatprep.subr.mxu0 0.0
        %1342 = vmatpush1.msra.mxu0 0.0
        %1343 = vmatprep.subr.mxu0 0.0
        %1344 = vmatpush1.msra.mxu0 0.0
        %1345 = vmatprep.subr.mxu0 0.0
        %1346 = vmatpush1.msra.mxu0 0.0
        %1347 = vmatprep.subr.mxu0 0.0
        %1348 = vmatpush1.msra.mxu0 0.0
        %1349 = vmatprep.subr.mxu0 0.0
        %1350 = vmatpush1.msra.mxu0 0.0
        %1351 = vmatprep.subr.mxu0 0.0
        %1352 = vmatpush1.msra.mxu0 0.0
        %1353 = vmatprep.subr.mxu0 0.0
        %1354 = vmatpush1.msra.mxu0 0.0
        %1355 = vmatprep.subr.mxu0 0.0
        %1356 = vmatpush1.msra.mxu0 0.0
        %1357 = vmatprep.subr.mxu0 0.0
        %1358 = vmatpush1.msra.mxu0 0.0
        %1359 = vmatprep.subr.mxu0 0.0
        %1360 = vmatpush1.msra.mxu0 0.0
        %1361 = vmatprep.subr.mxu0 0.0
        %1362 = vmatpush1.msra.mxu0 0.0
        %1363 = vmatprep.subr.mxu0 0.0
        %1364 = vmatpush1.msra.mxu0 0.0
        %1365 = vmatprep.subr.mxu0 0.0
        %1366 = vmatpush1.msra.mxu0 0.0
        %1367 = vmatprep.subr.mxu0 0.0
        %1368 = vmatpush1.msra.mxu0 0.0
        %1369 = vmatprep.subr.mxu0 0.0
        %1370 = vmatpush1.msra.mxu0 0.0
        %1371 = vmatprep.subr.mxu0 0.0
        %1372 = vmatpush1.msra.mxu0 0.0
        %1373 = vmatprep.subr.mxu0 0.0
        %1374 = vmatpush1.msra.mxu0 0.0
        %1375 = vmatprep.subr.mxu0 0.0
        %1376 = vmatpush1.msra.mxu0 0.0
        %1377 = vmatprep.subr.mxu0 0.0
        %1378 = vmatpush1.msra.mxu0 0.0
        %1379 = vmatprep.subr.mxu0 0.0
        %1380 = vmatpush1.msra.mxu0 0.0
        %1381 = vmatprep.subr.mxu0 0.0
        %1382 = vmatpush1.msra.mxu0 0.0
        %1383 = vmatprep.subr.mxu0 0.0
        %1384 = vmatpush1.msra.mxu0 0.0
        %1385 = vmatprep.subr.mxu0 0.0
        %1386 = vmatpush1.msra.mxu0 0.0
        %1387 = vmatprep.mubr.f32.mxu0 0.0
        %1388 = vmatmul.mubr.f32.gmra.mrb[0].mxu0 %v1315
        %v1389 = vpop.f32.mrb[0].mxu0
        %v1390 = vadd.f32 0.0, %v1389
        %v1391 = vpop.f32.mrb[0].mxu0
        %v1392 = vadd.f32 0.0, %v1391
        %1393 = vdwg.mxu0
        %v1394 = vadd.f32 %v1296, %v1390
        %v1395 = vadd.f32 %v1298, %v1392
        %1396 = vrot.lane.b32.xlu0 %v1125, 112
        %v1397 = vpop.permute.xlu0 %1396
        %1398 = vrot.lane.b32.xlu0 %v1121, 112
        %v1399 = vpop.permute.xlu0 %1398
        %1400 = vrot.lane.b32.xlu0 %v1126, 112
        %v1401 = vpop.permute.xlu0 %1400
        %v1402 = vsel %vm535, %v1397, %v1399
        %v1403 = vsel %vm535, %v1399, %v1401
        %v1406 = vsel %vm250, %v1402, 0.0
        %v1407 = vsel %vm251, %v1403, 0.0
        %s1408 = scalar_lea.vmem %s2, 12
        %v1409 = vld [vmem:[%s1408] sm:$0xf]
        %v1411 = vsel %vm268, %v1409, 0
        %v1414 = vsel %vm272, %v1406, 0
        %v1417 = vsel %vm272, %v1407, 0
        %1419 = vmatprep.subr.mxu0 %v1417
        %1420 = vmatpush1.msra.mxu0 %v1414
        %1421 = vmatprep.subr.mxu0 0.0
        %1422 = vmatpush1.msra.mxu0 0.0
        %1423 = vmatprep.subr.mxu0 0.0
        %1424 = vmatpush1.msra.mxu0 0.0
        %1425 = vmatprep.subr.mxu0 0.0
        %1426 = vmatpush1.msra.mxu0 0.0
        %1427 = vmatprep.subr.mxu0 0.0
        %1428 = vmatpush1.msra.mxu0 0.0
        %1429 = vmatprep.subr.mxu0 0.0
        %1430 = vmatpush1.msra.mxu0 0.0
        %1431 = vmatprep.subr.mxu0 0.0
        %1432 = vmatpush1.msra.mxu0 0.0
        %1433 = vmatprep.subr.mxu0 0.0
        %1434 = vmatpush1.msra.mxu0 0.0
        %1435 = vmatprep.subr.mxu0 0.0
        %1436 = vmatpush1.msra.mxu0 0.0
        %1437 = vmatprep.subr.mxu0 0.0
        %1438 = vmatpush1.msra.mxu0 0.0
        %1439 = vmatprep.subr.mxu0 0.0
        %1440 = vmatpush1.msra.mxu0 0.0
        %1441 = vmatprep.subr.mxu0 0.0
        %1442 = vmatpush1.msra.mxu0 0.0
        %1443 = vmatprep.subr.mxu0 0.0
        %1444 = vmatpush1.msra.mxu0 0.0
        %1445 = vmatprep.subr.mxu0 0.0
        %1446 = vmatpush1.msra.mxu0 0.0
        %1447 = vmatprep.subr.mxu0 0.0
        %1448 = vmatpush1.msra.mxu0 0.0
        %1449 = vmatprep.subr.mxu0 0.0
        %1450 = vmatpush1.msra.mxu0 0.0
        %1451 = vmatprep.subr.mxu0 0.0
        %1452 = vmatpush1.msra.mxu0 0.0
        %1453 = vmatprep.subr.mxu0 0.0
        %1454 = vmatpush1.msra.mxu0 0.0
        %1455 = vmatprep.subr.mxu0 0.0
        %1456 = vmatpush1.msra.mxu0 0.0
        %1457 = vmatprep.subr.mxu0 0.0
        %1458 = vmatpush1.msra.mxu0 0.0
        %1459 = vmatprep.subr.mxu0 0.0
        %1460 = vmatpush1.msra.mxu0 0.0
        %1461 = vmatprep.subr.mxu0 0.0
        %1462 = vmatpush1.msra.mxu0 0.0
        %1463 = vmatprep.subr.mxu0 0.0
        %1464 = vmatpush1.msra.mxu0 0.0
        %1465 = vmatprep.subr.mxu0 0.0
        %1466 = vmatpush1.msra.mxu0 0.0
        %1467 = vmatprep.subr.mxu0 0.0
        %1468 = vmatpush1.msra.mxu0 0.0
        %1469 = vmatprep.subr.mxu0 0.0
        %1470 = vmatpush1.msra.mxu0 0.0
        %1471 = vmatprep.subr.mxu0 0.0
        %1472 = vmatpush1.msra.mxu0 0.0
        %1473 = vmatprep.subr.mxu0 0.0
        %1474 = vmatpush1.msra.mxu0 0.0
        %1475 = vmatprep.subr.mxu0 0.0
        %1476 = vmatpush1.msra.mxu0 0.0
        %1477 = vmatprep.subr.mxu0 0.0
        %1478 = vmatpush1.msra.mxu0 0.0
        %1479 = vmatprep.subr.mxu0 0.0
        %1480 = vmatpush1.msra.mxu0 0.0
        %1481 = vmatprep.subr.mxu0 0.0
        %1482 = vmatpush1.msra.mxu0 0.0
        %1483 = vmatprep.mubr.f32.mxu0 0.0
        %1484 = vmatmul.mubr.f32.gmra.mrb[0].mxu0 %v1411
        %v1485 = vpop.f32.mrb[0].mxu0
        %v1486 = vadd.f32 0.0, %v1485
        %v1487 = vpop.f32.mrb[0].mxu0
        %v1488 = vadd.f32 0.0, %v1487
        %1489 = vdwg.mxu0
        %v1490 = vadd.f32 %v1394, %v1486
        %v1491 = vadd.f32 %v1395, %v1488
        %s1492 = scalar_lea.vmem %s2, 16
        %v1493 = vld [vmem:[%s1492] sm:$0xf]
        %1494 = vrot.lane.b32.xlu0 %v1125, 111
        %v1495 = vpop.permute.xlu0 %1494
        %1496 = vrot.lane.b32.xlu0 %v1121, 111
        %v1497 = vpop.permute.xlu0 %1496
        %1498 = vrot.lane.b32.xlu0 %v1126, 111
        %v1499 = vpop.permute.xlu0 %1498
        %v1500 = vsel %vm634, %v1495, %v1497
        %v1501 = vsel %vm634, %v1497, %v1499
        %v1503 = vsel %vm268, %v1493, 0
        %v1505 = vsel %vm272, %v1500, 0
        %v1507 = vsel %vm272, %v1501, 0
        %1509 = vmatprep.subr.mxu0 %v1507
        %1510 = vmatpush1.msra.mxu0 %v1505
        %1511 = vmatprep.subr.mxu0 0.0
        %1512 = vmatpush1.msra.mxu0 0.0
        %1513 = vmatprep.subr.mxu0 0.0
        %1514 = vmatpush1.msra.mxu0 0.0
        %1515 = vmatprep.subr.mxu0 0.0
        %1516 = vmatpush1.msra.mxu0 0.0
        %1517 = vmatprep.subr.mxu0 0.0
        %1518 = vmatpush1.msra.mxu0 0.0
        %1519 = vmatprep.subr.mxu0 0.0
        %1520 = vmatpush1.msra.mxu0 0.0
        %1521 = vmatprep.subr.mxu0 0.0
        %1522 = vmatpush1.msra.mxu0 0.0
        %1523 = vmatprep.subr.mxu0 0.0
        %1524 = vmatpush1.msra.mxu0 0.0
        %1525 = vmatprep.subr.mxu0 0.0
        %1526 = vmatpush1.msra.mxu0 0.0
        %1527 = vmatprep.subr.mxu0 0.0
        %1528 = vmatpush1.msra.mxu0 0.0
        %1529 = vmatprep.subr.mxu0 0.0
        %1530 = vmatpush1.msra.mxu0 0.0
        %1531 = vmatprep.subr.mxu0 0.0
        %1532 = vmatpush1.msra.mxu0 0.0
        %1533 = vmatprep.subr.mxu0 0.0
        %1534 = vmatpush1.msra.mxu0 0.0
        %1535 = vmatprep.subr.mxu0 0.0
        %1536 = vmatpush1.msra.mxu0 0.0
        %1537 = vmatprep.subr.mxu0 0.0
        %1538 = vmatpush1.msra.mxu0 0.0
        %1539 = vmatprep.subr.mxu0 0.0
        %1540 = vmatpush1.msra.mxu0 0.0
        %1541 = vmatprep.subr.mxu0 0.0
        %1542 = vmatpush1.msra.mxu0 0.0
        %1543 = vmatprep.subr.mxu0 0.0
        %1544 = vmatpush1.msra.mxu0 0.0
        %1545 = vmatprep.subr.mxu0 0.0
        %1546 = vmatpush1.msra.mxu0 0.0
        %1547 = vmatprep.subr.mxu0 0.0
        %1548 = vmatpush1.msra.mxu0 0.0
        %1549 = vmatprep.subr.mxu0 0.0
        %1550 = vmatpush1.msra.mxu0 0.0
        %1551 = vmatprep.subr.mxu0 0.0
        %1552 = vmatpush1.msra.mxu0 0.0
        %1553 = vmatprep.subr.mxu0 0.0
        %1554 = vmatpush1.msra.mxu0 0.0
        %1555 = vmatprep.subr.mxu0 0.0
        %1556 = vmatpush1.msra.mxu0 0.0
        %1557 = vmatprep.subr.mxu0 0.0
        %1558 = vmatpush1.msra.mxu0 0.0
        %1559 = vmatprep.subr.mxu0 0.0
        %1560 = vmatpush1.msra.mxu0 0.0
        %1561 = vmatprep.subr.mxu0 0.0
        %1562 = vmatpush1.msra.mxu0 0.0
        %1563 = vmatprep.subr.mxu0 0.0
        %1564 = vmatpush1.msra.mxu0 0.0
        %1565 = vmatprep.subr.mxu0 0.0
        %1566 = vmatpush1.msra.mxu0 0.0
        %1567 = vmatprep.subr.mxu0 0.0
        %1568 = vmatpush1.msra.mxu0 0.0
        %1569 = vmatprep.subr.mxu0 0.0
        %1570 = vmatpush1.msra.mxu0 0.0
        %1571 = vmatprep.subr.mxu0 0.0
        %1572 = vmatpush1.msra.mxu0 0.0
        %1573 = vmatprep.mubr.f32.mxu0 0.0
        %1574 = vmatmul.mubr.f32.gmra.mrb[0].mxu0 %v1503
        %v1575 = vpop.f32.mrb[0].mxu0
        %v1576 = vadd.f32 0.0, %v1575
        %v1577 = vpop.f32.mrb[0].mxu0
        %v1578 = vadd.f32 0.0, %v1577
        %1579 = vdwg.mxu0
        %v1580 = vadd.f32 %v1490, %v1576
        %v1581 = vadd.f32 %v1491, %v1578
        %1582 = vrot.lane.b32.xlu0 %v1125, 110
        %v1583 = vpop.permute.xlu0 %1582
        %1584 = vrot.lane.b32.xlu0 %v1121, 110
        %v1585 = vpop.permute.xlu0 %1584
        %1586 = vrot.lane.b32.xlu0 %v1126, 110
        %v1587 = vpop.permute.xlu0 %1586
        %v1588 = vsel %vm723, %v1583, %v1585
        %v1589 = vsel %vm723, %v1585, %v1587
        %v1592 = vsel %vm430, %v1588, 0.0
        %v1593 = vsel %vm431, %v1589, 0.0
        %s1594 = scalar_lea.vmem %s2, 20
        %v1595 = vld [vmem:[%s1594] sm:$0xf]
        %v1597 = vsel %vm268, %v1595, 0
        %v1600 = vsel %vm272, %v1592, 0
        %v1603 = vsel %vm272, %v1593, 0
        %1605 = vmatprep.subr.mxu0 %v1603
        %1606 = vmatpush1.msra.mxu0 %v1600
        %1607 = vmatprep.subr.mxu0 0.0
        %1608 = vmatpush1.msra.mxu0 0.0
        %1609 = vmatprep.subr.mxu0 0.0
        %1610 = vmatpush1.msra.mxu0 0.0
        %1611 = vmatprep.subr.mxu0 0.0
        %1612 = vmatpush1.msra.mxu0 0.0
        %1613 = vmatprep.subr.mxu0 0.0
        %1614 = vmatpush1.msra.mxu0 0.0
        %1615 = vmatprep.subr.mxu0 0.0
        %1616 = vmatpush1.msra.mxu0 0.0
        %1617 = vmatprep.subr.mxu0 0.0
        %1618 = vmatpush1.msra.mxu0 0.0
        %1619 = vmatprep.subr.mxu0 0.0
        %1620 = vmatpush1.msra.mxu0 0.0
        %1621 = vmatprep.subr.mxu0 0.0
        %1622 = vmatpush1.msra.mxu0 0.0
        %1623 = vmatprep.subr.mxu0 0.0
        %1624 = vmatpush1.msra.mxu0 0.0
        %1625 = vmatprep.subr.mxu0 0.0
        %1626 = vmatpush1.msra.mxu0 0.0
        %1627 = vmatprep.subr.mxu0 0.0
        %1628 = vmatpush1.msra.mxu0 0.0
        %1629 = vmatprep.subr.mxu0 0.0
        %1630 = vmatpush1.msra.mxu0 0.0
        %1631 = vmatprep.subr.mxu0 0.0
        %1632 = vmatpush1.msra.mxu0 0.0
        %1633 = vmatprep.subr.mxu0 0.0
        %1634 = vmatpush1.msra.mxu0 0.0
        %1635 = vmatprep.subr.mxu0 0.0
        %1636 = vmatpush1.msra.mxu0 0.0
        %1637 = vmatprep.subr.mxu0 0.0
        %1638 = vmatpush1.msra.mxu0 0.0
        %1639 = vmatprep.subr.mxu0 0.0
        %1640 = vmatpush1.msra.mxu0 0.0
        %1641 = vmatprep.subr.mxu0 0.0
        %1642 = vmatpush1.msra.mxu0 0.0
        %1643 = vmatprep.subr.mxu0 0.0
        %1644 = vmatpush1.msra.mxu0 0.0
        %1645 = vmatprep.subr.mxu0 0.0
        %1646 = vmatpush1.msra.mxu0 0.0
        %1647 = vmatprep.subr.mxu0 0.0
        %1648 = vmatpush1.msra.mxu0 0.0
        %1649 = vmatprep.subr.mxu0 0.0
        %1650 = vmatpush1.msra.mxu0 0.0
        %1651 = vmatprep.subr.mxu0 0.0
        %1652 = vmatpush1.msra.mxu0 0.0
        %1653 = vmatprep.subr.mxu0 0.0
        %1654 = vmatpush1.msra.mxu0 0.0
        %1655 = vmatprep.subr.mxu0 0.0
        %1656 = vmatpush1.msra.mxu0 0.0
        %1657 = vmatprep.subr.mxu0 0.0
        %1658 = vmatpush1.msra.mxu0 0.0
        %1659 = vmatprep.subr.mxu0 0.0
        %1660 = vmatpush1.msra.mxu0 0.0
        %1661 = vmatprep.subr.mxu0 0.0
        %1662 = vmatpush1.msra.mxu0 0.0
        %1663 = vmatprep.subr.mxu0 0.0
        %1664 = vmatpush1.msra.mxu0 0.0
        %1665 = vmatprep.subr.mxu0 0.0
        %1666 = vmatpush1.msra.mxu0 0.0
        %1667 = vmatprep.subr.mxu0 0.0
        %1668 = vmatpush1.msra.mxu0 0.0
        %1669 = vmatprep.mubr.f32.mxu0 0.0
        %1670 = vmatmul.mubr.f32.gmra.mrb[0].mxu0 %v1597
        %v1671 = vpop.f32.mrb[0].mxu0
        %v1672 = vadd.f32 0.0, %v1671
        %v1673 = vpop.f32.mrb[0].mxu0
        %v1674 = vadd.f32 0.0, %v1673
        %1675 = vdwg.mxu0
        %v1676 = vadd.f32 %v1580, %v1672
        %v1677 = vadd.f32 %v1581, %v1674
        %1678 = vrot.lane.b32.xlu0 %v1125, 96
        %v1679 = vpop.permute.xlu0 %1678
        %1680 = vrot.lane.b32.xlu0 %v1121, 96
        %v1681 = vpop.permute.xlu0 %1680
        %1682 = vrot.lane.b32.xlu0 %v1126, 96
        %v1683 = vpop.permute.xlu0 %1682
        %v1684 = vsel %vm820, %v1679, %v1681
        %v1685 = vsel %vm820, %v1681, %v1683
        %v1688 = vsel %vm250, %v1684, 0.0
        %v1689 = vsel %vm251, %v1685, 0.0
        %s1690 = scalar_lea.vmem %s2, 24
        %v1691 = vld [vmem:[%s1690] sm:$0xf]
        %v1693 = vsel %vm268, %v1691, 0
        %v1696 = vsel %vm272, %v1688, 0
        %v1699 = vsel %vm272, %v1689, 0
        %1701 = vmatprep.subr.mxu0 %v1699
        %1702 = vmatpush1.msra.mxu0 %v1696
        %1703 = vmatprep.subr.mxu0 0.0
        %1704 = vmatpush1.msra.mxu0 0.0
        %1705 = vmatprep.subr.mxu0 0.0
        %1706 = vmatpush1.msra.mxu0 0.0
        %1707 = vmatprep.subr.mxu0 0.0
        %1708 = vmatpush1.msra.mxu0 0.0
        %1709 = vmatprep.subr.mxu0 0.0
        %1710 = vmatpush1.msra.mxu0 0.0
        %1711 = vmatprep.subr.mxu0 0.0
        %1712 = vmatpush1.msra.mxu0 0.0
        %1713 = vmatprep.subr.mxu0 0.0
        %1714 = vmatpush1.msra.mxu0 0.0
        %1715 = vmatprep.subr.mxu0 0.0
        %1716 = vmatpush1.msra.mxu0 0.0
        %1717 = vmatprep.subr.mxu0 0.0
        %1718 = vmatpush1.msra.mxu0 0.0
        %1719 = vmatprep.subr.mxu0 0.0
        %1720 = vmatpush1.msra.mxu0 0.0
        %1721 = vmatprep.subr.mxu0 0.0
        %1722 = vmatpush1.msra.mxu0 0.0
        %1723 = vmatprep.subr.mxu0 0.0
        %1724 = vmatpush1.msra.mxu0 0.0
        %1725 = vmatprep.subr.mxu0 0.0
        %1726 = vmatpush1.msra.mxu0 0.0
        %1727 = vmatprep.subr.mxu0 0.0
        %1728 = vmatpush1.msra.mxu0 0.0
        %1729 = vmatprep.subr.mxu0 0.0
        %1730 = vmatpush1.msra.mxu0 0.0
        %1731 = vmatprep.subr.mxu0 0.0
        %1732 = vmatpush1.msra.mxu0 0.0
        %1733 = vmatprep.subr.mxu0 0.0
        %1734 = vmatpush1.msra.mxu0 0.0
        %1735 = vmatprep.subr.mxu0 0.0
        %1736 = vmatpush1.msra.mxu0 0.0
        %1737 = vmatprep.subr.mxu0 0.0
        %1738 = vmatpush1.msra.mxu0 0.0
        %1739 = vmatprep.subr.mxu0 0.0
        %1740 = vmatpush1.msra.mxu0 0.0
        %1741 = vmatprep.subr.mxu0 0.0
        %1742 = vmatpush1.msra.mxu0 0.0
        %1743 = vmatprep.subr.mxu0 0.0
        %1744 = vmatpush1.msra.mxu0 0.0
        %1745 = vmatprep.subr.mxu0 0.0
        %1746 = vmatpush1.msra.mxu0 0.0
        %1747 = vmatprep.subr.mxu0 0.0
        %1748 = vmatpush1.msra.mxu0 0.0
        %1749 = vmatprep.subr.mxu0 0.0
        %1750 = vmatpush1.msra.mxu0 0.0
        %1751 = vmatprep.subr.mxu0 0.0
        %1752 = vmatpush1.msra.mxu0 0.0
        %1753 = vmatprep.subr.mxu0 0.0
        %1754 = vmatpush1.msra.mxu0 0.0
        %1755 = vmatprep.subr.mxu0 0.0
        %1756 = vmatpush1.msra.mxu0 0.0
        %1757 = vmatprep.subr.mxu0 0.0
        %1758 = vmatpush1.msra.mxu0 0.0
        %1759 = vmatprep.subr.mxu0 0.0
        %1760 = vmatpush1.msra.mxu0 0.0
        %1761 = vmatprep.subr.mxu0 0.0
        %1762 = vmatpush1.msra.mxu0 0.0
        %1763 = vmatprep.subr.mxu0 0.0
        %1764 = vmatpush1.msra.mxu0 0.0
        %1765 = vmatprep.mubr.f32.mxu0 0.0
        %1766 = vmatmul.mubr.f32.gmra.mrb[0].mxu0 %v1693
        %v1767 = vpop.f32.mrb[0].mxu0
        %v1768 = vadd.f32 0.0, %v1767
        %v1769 = vpop.f32.mrb[0].mxu0
        %v1770 = vadd.f32 0.0, %v1769
        %1771 = vdwg.mxu0
        %v1772 = vadd.f32 %v1676, %v1768
        %v1773 = vadd.f32 %v1677, %v1770
        %s1774 = scalar_lea.vmem %s2, 28
        %v1775 = vld [vmem:[%s1774] sm:$0xf]
        %1776 = vrot.lane.b32.xlu0 %v1125, 95
        %v1777 = vpop.permute.xlu0 %1776
        %1778 = vrot.lane.b32.xlu0 %v1121, 95
        %v1779 = vpop.permute.xlu0 %1778
        %1780 = vrot.lane.b32.xlu0 %v1126, 95
        %v1781 = vpop.permute.xlu0 %1780
        %v1782 = vsel %vm919, %v1777, %v1779
        %v1783 = vsel %vm919, %v1779, %v1781
        %v1785 = vsel %vm268, %v1775, 0
        %v1787 = vsel %vm272, %v1782, 0
        %v1789 = vsel %vm272, %v1783, 0
        %1791 = vmatprep.subr.mxu0 %v1789
        %1792 = vmatpush1.msra.mxu0 %v1787
        %1793 = vmatprep.subr.mxu0 0.0
        %1794 = vmatpush1.msra.mxu0 0.0
        %1795 = vmatprep.subr.mxu0 0.0
        %1796 = vmatpush1.msra.mxu0 0.0
        %1797 = vmatprep.subr.mxu0 0.0
        %1798 = vmatpush1.msra.mxu0 0.0
        %1799 = vmatprep.subr.mxu0 0.0
        %1800 = vmatpush1.msra.mxu0 0.0
        %1801 = vmatprep.subr.mxu0 0.0
        %1802 = vmatpush1.msra.mxu0 0.0
        %1803 = vmatprep.subr.mxu0 0.0
        %1804 = vmatpush1.msra.mxu0 0.0
        %1805 = vmatprep.subr.mxu0 0.0
        %1806 = vmatpush1.msra.mxu0 0.0
        %1807 = vmatprep.subr.mxu0 0.0
        %1808 = vmatpush1.msra.mxu0 0.0
        %1809 = vmatprep.subr.mxu0 0.0
        %1810 = vmatpush1.msra.mxu0 0.0
        %1811 = vmatprep.subr.mxu0 0.0
        %1812 = vmatpush1.msra.mxu0 0.0
        %1813 = vmatprep.subr.mxu0 0.0
        %1814 = vmatpush1.msra.mxu0 0.0
        %1815 = vmatprep.subr.mxu0 0.0
        %1816 = vmatpush1.msra.mxu0 0.0
        %1817 = vmatprep.subr.mxu0 0.0
        %1818 = vmatpush1.msra.mxu0 0.0
        %1819 = vmatprep.subr.mxu0 0.0
        %1820 = vmatpush1.msra.mxu0 0.0
        %1821 = vmatprep.subr.mxu0 0.0
        %1822 = vmatpush1.msra.mxu0 0.0
        %1823 = vmatprep.subr.mxu0 0.0
        %1824 = vmatpush1.msra.mxu0 0.0
        %1825 = vmatprep.subr.mxu0 0.0
        %1826 = vmatpush1.msra.mxu0 0.0
        %1827 = vmatprep.subr.mxu0 0.0
        %1828 = vmatpush1.msra.mxu0 0.0
        %1829 = vmatprep.subr.mxu0 0.0
        %1830 = vmatpush1.msra.mxu0 0.0
        %1831 = vmatprep.subr.mxu0 0.0
        %1832 = vmatpush1.msra.mxu0 0.0
        %1833 = vmatprep.subr.mxu0 0.0
        %1834 = vmatpush1.msra.mxu0 0.0
        %1835 = vmatprep.subr.mxu0 0.0
        %1836 = vmatpush1.msra.mxu0 0.0
        %1837 = vmatprep.subr.mxu0 0.0
        %1838 = vmatpush1.msra.mxu0 0.0
        %1839 = vmatprep.subr.mxu0 0.0
        %1840 = vmatpush1.msra.mxu0 0.0
        %1841 = vmatprep.subr.mxu0 0.0
        %1842 = vmatpush1.msra.mxu0 0.0
        %1843 = vmatprep.subr.mxu0 0.0
        %1844 = vmatpush1.msra.mxu0 0.0
        %1845 = vmatprep.subr.mxu0 0.0
        %1846 = vmatpush1.msra.mxu0 0.0
        %1847 = vmatprep.subr.mxu0 0.0
        %1848 = vmatpush1.msra.mxu0 0.0
        %1849 = vmatprep.subr.mxu0 0.0
        %1850 = vmatpush1.msra.mxu0 0.0
        %1851 = vmatprep.subr.mxu0 0.0
        %1852 = vmatpush1.msra.mxu0 0.0
        %1853 = vmatprep.subr.mxu0 0.0
        %1854 = vmatpush1.msra.mxu0 0.0
        %1855 = vmatprep.mubr.f32.mxu0 0.0
        %1856 = vmatmul.mubr.f32.gmra.mrb[0].mxu0 %v1785
        %v1857 = vpop.f32.mrb[0].mxu0
        %v1858 = vadd.f32 0.0, %v1857
        %v1859 = vpop.f32.mrb[0].mxu0
        %v1860 = vadd.f32 0.0, %v1859
        %1861 = vdwg.mxu0
        %v1862 = vadd.f32 %v1772, %v1858
        %v1863 = vadd.f32 %v1773, %v1860
        %1864 = vrot.lane.b32.xlu0 %v1125, 94
        %v1865 = vpop.permute.xlu0 %1864
        %1866 = vrot.lane.b32.xlu0 %v1121, 94
        %v1867 = vpop.permute.xlu0 %1866
        %1868 = vrot.lane.b32.xlu0 %v1126, 94
        %v1869 = vpop.permute.xlu0 %1868
        %v1870 = vsel %vm1008, %v1865, %v1867
        %v1871 = vsel %vm1008, %v1867, %v1869
        %v1874 = vsel %vm430, %v1870, 0.0
        %v1875 = vsel %vm431, %v1871, 0.0
        %s1876 = scalar_lea.vmem %s2, 32
        %v1877 = vld [vmem:[%s1876] sm:$0xf]
        %v1879 = vsel %vm268, %v1877, 0
        %v1882 = vsel %vm272, %v1874, 0
        %v1885 = vsel %vm272, %v1875, 0
        %1887 = vmatprep.subr.mxu0 %v1885
        %1888 = vmatpush1.msra.mxu0 %v1882
        %1889 = vmatprep.subr.mxu0 0.0
        %1890 = vmatpush1.msra.mxu0 0.0
        %1891 = vmatprep.subr.mxu0 0.0
        %1892 = vmatpush1.msra.mxu0 0.0
        %1893 = vmatprep.subr.mxu0 0.0
        %1894 = vmatpush1.msra.mxu0 0.0
        %1895 = vmatprep.subr.mxu0 0.0
        %1896 = vmatpush1.msra.mxu0 0.0
        %1897 = vmatprep.subr.mxu0 0.0
        %1898 = vmatpush1.msra.mxu0 0.0
        %1899 = vmatprep.subr.mxu0 0.0
        %1900 = vmatpush1.msra.mxu0 0.0
        %1901 = vmatprep.subr.mxu0 0.0
        %1902 = vmatpush1.msra.mxu0 0.0
        %1903 = vmatprep.subr.mxu0 0.0
        %1904 = vmatpush1.msra.mxu0 0.0
        %1905 = vmatprep.subr.mxu0 0.0
        %1906 = vmatpush1.msra.mxu0 0.0
        %1907 = vmatprep.subr.mxu0 0.0
        %1908 = vmatpush1.msra.mxu0 0.0
        %1909 = vmatprep.subr.mxu0 0.0
        %1910 = vmatpush1.msra.mxu0 0.0
        %1911 = vmatprep.subr.mxu0 0.0
        %1912 = vmatpush1.msra.mxu0 0.0
        %1913 = vmatprep.subr.mxu0 0.0
        %1914 = vmatpush1.msra.mxu0 0.0
        %1915 = vmatprep.subr.mxu0 0.0
        %1916 = vmatpush1.msra.mxu0 0.0
        %1917 = vmatprep.subr.mxu0 0.0
        %1918 = vmatpush1.msra.mxu0 0.0
        %1919 = vmatprep.subr.mxu0 0.0
        %1920 = vmatpush1.msra.mxu0 0.0
        %1921 = vmatprep.subr.mxu0 0.0
        %1922 = vmatpush1.msra.mxu0 0.0
        %1923 = vmatprep.subr.mxu0 0.0
        %1924 = vmatpush1.msra.mxu0 0.0
        %1925 = vmatprep.subr.mxu0 0.0
        %1926 = vmatpush1.msra.mxu0 0.0
        %1927 = vmatprep.subr.mxu0 0.0
        %1928 = vmatpush1.msra.mxu0 0.0
        %1929 = vmatprep.subr.mxu0 0.0
        %1930 = vmatpush1.msra.mxu0 0.0
        %1931 = vmatprep.subr.mxu0 0.0
        %1932 = vmatpush1.msra.mxu0 0.0
        %1933 = vmatprep.subr.mxu0 0.0
        %1934 = vmatpush1.msra.mxu0 0.0
        %1935 = vmatprep.subr.mxu0 0.0
        %1936 = vmatpush1.msra.mxu0 0.0
        %1937 = vmatprep.subr.mxu0 0.0
        %1938 = vmatpush1.msra.mxu0 0.0
        %1939 = vmatprep.subr.mxu0 0.0
        %1940 = vmatpush1.msra.mxu0 0.0
        %1941 = vmatprep.subr.mxu0 0.0
        %1942 = vmatpush1.msra.mxu0 0.0
        %1943 = vmatprep.subr.mxu0 0.0
        %1944 = vmatpush1.msra.mxu0 0.0
        %1945 = vmatprep.subr.mxu0 0.0
        %1946 = vmatpush1.msra.mxu0 0.0
        %1947 = vmatprep.subr.mxu0 0.0
        %1948 = vmatpush1.msra.mxu0 0.0
        %1949 = vmatprep.subr.mxu0 0.0
        %1950 = vmatpush1.msra.mxu0 0.0
        %1951 = vmatprep.mubr.f32.mxu0 0.0
        %1952 = vmatmul.mubr.f32.gmra.mrb[0].mxu0 %v1879
        %v1953 = vpop.f32.mrb[0].mxu0
        %v1954 = vadd.f32 0.0, %v1953
        %v1955 = vpop.f32.mrb[0].mxu0
        %v1956 = vadd.f32 0.0, %v1955
        %1957 = vdwg.mxu0
        %v1958 = vadd.f32 %v1862, %v1954
        %v1959 = vadd.f32 %v1863, %v1956
        %1961 = vset.pattern.permute.xlu0 0
        %1962 = vperm.xlu0 %1961, %v232
        %v1963 = vpop.permute.xlu0 %1962
        %v1965 = vmul.f32 %v1958, %v1963
        %v1966 = vmul.f32 %v1959, %v1963
        %1968 = vset.pattern.permute.xlu0 0
        %1969 = vperm.xlu0 %1968, %v234
        %v1970 = vpop.permute.xlu0 %1969
        %v1972 = vadd.f32 %v1965, %v1970
        %v1973 = vadd.f32 %v1966, %v1970
        %v1975 = vadd.f32 %v1972, %v196
        %v1976 = vadd.f32 %v1973, %v236
        %v1977 = vmax.f32 %v1975, 0.0
        %v1978 = vmax.f32 %v1976, 0.0
        %v1981 = vcombine.low %v1977, %v1978
        %1983 = vst [vmem:[%s190] sm:$0xff] %v1981
        %s1984 = sand.u32 %s115, 1
        %s1985 = scalar_lea.sflag [#allocation3], %s1984
        %s1986 = sand.u32 %s115, 1
        %s1987 = smul.addr %s1986, 8
        %s1988 = scalar_lea.vmem [#allocation2], %s1987
        // Predicated region
        $region37: #{tpu_custom_call.1} parent=35 // pred_check
          %p1989 = pneg %p125
        $region38: #{tpu_custom_call.1} parent=35 // pred_check_branch
          %1991 = sbr.rel (%p1989) target = $region40
        $region39: #{tpu_custom_call.1} parent=35 // pred_region
          %s1993 = ssub.s32 128, 128
          %1994 = vsyncadd %s1985, %s1993
          %s1995 = smul.addr %s18, 2
          %s1996 = smul.addr %s1995, 64
          %s1997 = scalar_lea.hbm %s4, %s1996
          %s1999 = sshll.u32 %s1988, 4
          %s2000 = int_to_ptr.vmem [resolvable:$true] %s1999
          %2002 = dma.vmem_to_hbm [thread:$0]  %s2000, 128, %s1997, %s1985
        $region40: #{tpu_custom_call.1} parent=35 // pred_fallthru
          _
      $region36: #{tpu_custom_call.1} parent=5 // pred_fallthru
        _
      %p2003 = scmp.le.s32.totalorder 2, %s13
      // Predicated region
      $region41: #{tpu_custom_call.1} parent=5 // pred_check
        %p2004 = pneg %p2003
      $region42: #{tpu_custom_call.1} parent=5 // pred_check_branch
        %2006 = sbr.rel (%p2004) target = $region44
      $region43: #{tpu_custom_call.1} parent=5 // pred_region
        %s2007 = ssub.s32 %s13, 2
        // Predicated region
        $region45: #{tpu_custom_call.1} parent=43 // pred_check
          %p2008 = pneg %p131
        $region46: #{tpu_custom_call.1} parent=43 // pred_check_branch
          %2010 = sbr.rel (%p2008) target = $region48
        $region47: #{tpu_custom_call.1} parent=43 // pred_region
          %s2011 = sand.u32 %s116, 1
          %s2012 = scalar_lea.sflag [#allocation3], %s2011
          %s2013 = sand.u32 %s116, 1
          %s2014 = smul.addr %s2013, 8
          %s2015 = scalar_lea.vmem [#allocation2], %s2014
          %2016 = dma.done %s2012, 128
        $region48: #{tpu_custom_call.1} parent=43 // pred_fallthru
          _
      $region44: #{tpu_custom_call.1} parent=5 // pred_fallthru
        _
    $region6: #{tpu_custom_call.1} parent=1 // loop_footer
      %s17 = sadd.s32 1, %s13
    $region7: #{tpu_custom_call.1} parent=1 // loop_footer_branch
      %12 = sbr.rel target = $region3
    $region8: #{tpu_custom_call.1} parent=1 // loop_exit
      _
    %2017 = vsyncpa [#allocation3], 1
    %s2018 = scalar_lea.sflag [#allocation3], 1
    %2019 = vsyncpa %s2018, 1

</llo_original>
